<compile_context>
chip_gen: v7x
topology: tpu7x:2x2x1
jax: 0.10.0
libtpu: 0.0.40
codegen_flags: <defaults>
</compile_context>

<pallas_src>
import functools

import jax
import jax.numpy as jnp
from jax import lax
from jax.experimental import pallas as pl
from jax.experimental.pallas import tpu as pltpu


def _make_kernel(Bp, T, D, H, C_pad):
    def kernel(x_ref, w_ih_ref, w_hh_ref, b_g_ref, w_head_ref, b_head_ref,
               out_ref):
        # x_ref:      (T*Bp, D)    bf16, time-major rows (row = t*Bp + b), Bp % 8 == 0
        # w_ih_ref:   (D, 4H)      bf16
        # w_hh_ref:   (H, 4H)      f32   (tiny; lives on the serial chain)
        # b_g_ref:    (1, 4H)      f32   (b_ih + b_hh)
        # w_head_ref: (H, C_pad)   bf16  fused [pos_head | group_head], lane-padded
        # b_head_ref: (1, C_pad)   f32
        # out_ref:    (T*Bp, C_pad) f32

        # Fused input projection for ALL timesteps: one MXU dot, f32 accumulate.
        gx = (jnp.dot(x_ref[...], w_ih_ref[...],
                      preferred_element_type=jnp.float32) + b_g_ref[...])

        w_hh = w_hh_ref[...]
        h = jnp.zeros((Bp, H), jnp.float32)
        c = jnp.zeros((Bp, H), jnp.float32)
        hs = []

        # Inherently-serial LSTM recurrence. T is small & static, so the loop is
        # fully unrolled; every row slice is a static, sublane-aligned slab.
        # PyTorch gate order: i, f, g, o.
        for t in range(T):
            r0 = t * Bp
            gates = gx[r0:r0 + Bp, :] + jnp.dot(
                h, w_hh, preferred_element_type=jnp.float32)
            # Two full-(4H=128)-lane EUP pushes per step (sigmoid via tanh, no
            # divide), then slice the gates out of the already-activated vregs.
            sig = 0.5 * jnp.tanh(0.5 * gates) + 0.5
            th = jnp.tanh(gates)
            i_g = sig[:, 0 * H:1 * H]
            f_g = sig[:, 1 * H:2 * H]
            g_g = th[:, 2 * H:3 * H]
            o_g = sig[:, 3 * H:4 * H]
            c = f_g * c + i_g * g_g
            h = o_g * jnp.tanh(c)
            hs.append(h)

        # Hidden sequence stays in vregs (no VMEM scratch round-trip); one fused
        # lane-dense head matmul + store.
        h_all = jnp.concatenate(hs, axis=0).astype(jnp.bfloat16)
        out_ref[...] = (jnp.dot(h_all, w_head_ref[...],
                                preferred_element_type=jnp.float32)
                        + b_head_ref[...])

    return kernel


def recurrent_predictor_forward(x, params, *, hidden_size, n_particles,
                                n_group_classes):
    B, T, D = x.shape
    H, P, G = hidden_size, n_particles, n_group_classes
    C_out = 3 * P + G * P

    # Sublane / lane padding so every in-kernel slice and store is tile-aligned.
    Bp = max(8, ((B + 7) // 8) * 8)
    C_pad = ((C_out + 127) // 128) * 128

    # ---- plain-JAX glue: layout / dtype conversion of inputs & weights ----
    x_tm = jnp.transpose(x, (1, 0, 2)).astype(jnp.float32)          # (T, B, D)
    x_tm = jnp.pad(x_tm, ((0, 0), (0, Bp - B), (0, 0)))             # (T, Bp, D)
    x2d = x_tm.reshape(T * Bp, D).astype(jnp.bfloat16)

    w_head = jnp.concatenate([params["pos_w"], params["grp_w"]], axis=0).T  # (H, C_out)
    b_head = jnp.concatenate([params["pos_b"], params["grp_b"]]).reshape(1, C_out)
    if C_pad != C_out:
        w_head = jnp.pad(w_head, ((0, 0), (0, C_pad - C_out)))
        b_head = jnp.pad(b_head, ((0, 0), (0, C_pad - C_out)))

    args = [
        x2d,                                                          # (T*Bp, D) bf16
        params["w_ih"].T.astype(jnp.bfloat16),                        # (D, 4H)  bf16
        params["w_hh"].T.astype(jnp.float32),                         # (H, 4H)  f32
        (params["b_ih"] + params["b_hh"]).reshape(1, 4 * H).astype(jnp.float32),
        w_head.astype(jnp.bfloat16),                                  # (H, C_pad) bf16
        b_head.astype(jnp.float32),                                   # (1, C_pad) f32
    ]

    flops = 2 * (T * Bp * D * 4 * H            # input projection
                 + T * Bp * H * 4 * H          # recurrent dots
                 + T * Bp * H * C_pad)         # fused heads
    transcendentals = T * Bp * (2 * 4 * H + H)  # 2 full-gate tanh + tanh(c) per step
    bytes_accessed = (sum(int(a.size) * a.dtype.itemsize for a in args)
                      + T * Bp * C_pad * 4)

    kernel = _make_kernel(Bp, T, D, H, C_pad)
    vmem = pl.BlockSpec(memory_space=pltpu.MemorySpace.VMEM)
    out = pl.pallas_call(
        kernel,
        out_shape=jax.ShapeDtypeStruct((T * Bp, C_pad), jnp.float32),
        in_specs=[vmem] * len(args),
        out_specs=vmem,
        cost_estimate=pl.CostEstimate(flops=flops,
                                      transcendentals=transcendentals,
                                      bytes_accessed=bytes_accessed),
    )(*args)

    # Drop padded batch rows / padded head lanes, back to (B, T, ...).
    out = out.reshape(T, Bp, C_pad)[:, :B, :C_out].transpose(1, 0, 2)  # (B, T, C_out)
    pred_pos = out[..., :3 * P].reshape(B, T, 3, P)
    pred_grp = out[..., 3 * P:].reshape(B, T, P, G)
    return pred_pos, pred_grp


# ---------------- pure-JAX reference (mirrors the PyTorch module) ----------------
def reference_forward(x, params, *, hidden_size, n_particles, n_group_classes):
    B, T, D = x.shape
    H, P, G = hidden_size, n_particles, n_group_classes
    w_ih, w_hh = params["w_ih"], params["w_hh"]
    b_ih, b_hh = params["b_ih"], params["b_hh"]

    def step(carry, x_t):
        h, c = carry
        gates = x_t @ w_ih.T + b_ih + h @ w_hh.T + b_hh
        i, f, g, o = jnp.split(gates, 4, axis=-1)
        i = jax.nn.sigmoid(i)
        f = jax.nn.sigmoid(f)
        g = jnp.tanh(g)
        o = jax.nn.sigmoid(o)
        c = f * c + i * g
        h = o * jnp.tanh(c)
        return (h, c), h

    init = (jnp.zeros((B, H), jnp.float32), jnp.zeros((B, H), jnp.float32))
    (_, _), hs = lax.scan(step, init, jnp.transpose(x, (1, 0, 2)))   # hs: (T, B, H)
    flat = jnp.transpose(hs, (1, 0, 2)).reshape(B * T, H)
    pos = (flat @ params["pos_w"].T + params["pos_b"]).reshape(B, T, 3, P)
    grp = (flat @ params["grp_w"].T + params["grp_b"]).reshape(B, T, P, G)
    return pos, grp


def init_params(key, D, H, P, G):
    keys = iter(jax.random.split(key, 16))

    def nrm(shape, scale=0.1):
        return scale * jax.random.normal(next(keys), shape, dtype=jnp.float32)

    return {
        "w_ih": nrm((4 * H, D)), "w_hh": nrm((4 * H, H)),
        "b_ih": nrm((4 * H,)),   "b_hh": nrm((4 * H,)),
        "pos_w": nrm((3 * P, H)), "pos_b": nrm((3 * P,)),
        "grp_w": nrm((G * P, H)), "grp_b": nrm((G * P,)),
    }


if __name__ == "__main__":
    # Small config consistent with the module: input_size=16, hidden_size=32,
    # n_frames T=8, batch B=2, module defaults n_particles=192, n_group_classes=3.
    B, T, D, H = 2, 8, 16, 32
    P, G = 192, 3
    key = jax.random.PRNGKey(0)
    kx, kp = jax.random.split(key)
    x = jax.random.normal(kx, (B, T, D), dtype=jnp.float32)
    params = init_params(kp, D, H, P, G)

    fwd = jax.jit(functools.partial(
        recurrent_predictor_forward,
        hidden_size=H, n_particles=P, n_group_classes=G))
    pos, grp = fwd(x, params)
    pos, grp = jax.block_until_ready((pos, grp))

    pos_ref, grp_ref = reference_forward(
        x, params, hidden_size=H, n_particles=P, n_group_classes=G)

    assert pos.shape == (B, T, 3, P) and grp.shape == (B, T, P, G)
    # bf16 MXU inputs (f32 accumulate) vs. f32 reference -> modest tolerance.
    assert jnp.allclose(pos, pos_ref, rtol=2e-2, atol=2e-2), "pos head mismatch"
    assert jnp.allclose(grp, grp_ref, rtol=2e-2, atol=2e-2), "grp head mismatch"

    print("KERNEL_OK")
</pallas_src>

<mosaic_0001>
module attributes {stable_mosaic.version = 11 : i64} {
  func.func @kernel(%arg0: memref<64x16xbf16, #tpu.memory_space<vmem>>, %arg1: memref<16x128xbf16, #tpu.memory_space<vmem>>, %arg2: memref<32x128xf32, #tpu.memory_space<vmem>>, %arg3: memref<1x128xf32, #tpu.memory_space<vmem>>, %arg4: memref<32x1152xbf16, #tpu.memory_space<vmem>>, %arg5: memref<1x1152xf32, #tpu.memory_space<vmem>>, %arg6: memref<64x1152xf32, #tpu.memory_space<vmem>>) attributes {dimension_semantics = [], scalar_prefetch = 0 : i64, scratch_operands = 0 : i64, tpu.core_type = #tpu.core_type<tc>} {
    %c0 = arith.constant 0 : index
    %c0_0 = arith.constant 0 : index
    %0 = vector.load %arg0[%c0, %c0_0] : memref<64x16xbf16, #tpu.memory_space<vmem>>, vector<64x16xbf16>
    %c0_1 = arith.constant 0 : index
    %c0_2 = arith.constant 0 : index
    %1 = vector.load %arg1[%c0_1, %c0_2] : memref<16x128xbf16, #tpu.memory_space<vmem>>, vector<16x128xbf16>
    %cst = arith.constant dense<0.000000e+00> : vector<64x128xf32>
    %2 = tpu.matmul %0, %1, %cst {dimension_numbers = #tpu.dot_dimension_numbers<[1], [0], [0], [1], [0, 0, 1, 1], [], []>} : vector<64x16xbf16>, vector<16x128xbf16>, vector<64x128xf32> -> vector<64x128xf32>
    %c0_3 = arith.constant 0 : index
    %c0_4 = arith.constant 0 : index
    %3 = vector.load %arg3[%c0_3, %c0_4] : memref<1x128xf32, #tpu.memory_space<vmem>>, vector<1x128xf32>
    %4 = vector.broadcast %3 : vector<1x128xf32> to vector<64x128xf32>
    %5 = arith.addf %2, %4 : vector<64x128xf32>
    %c0_5 = arith.constant 0 : index
    %c0_6 = arith.constant 0 : index
    %6 = vector.load %arg2[%c0_5, %c0_6] : memref<32x128xf32, #tpu.memory_space<vmem>>, vector<32x128xf32>
    %cst_7 = arith.constant 0.000000e+00 : f32
    %7 = vector.broadcast %cst_7 : f32 to vector<8x32xf32>
    %cst_8 = arith.constant 0.000000e+00 : f32
    %8 = vector.broadcast %cst_8 : f32 to vector<8x32xf32>
    %9 = vector.extract_strided_slice %5 {offsets = [0, 0], sizes = [8, 128], strides = [1, 1]} : vector<64x128xf32> to vector<8x128xf32>
    %cst_9 = arith.constant dense<0.000000e+00> : vector<8x128xf32>
    %10 = tpu.matmul %7, %6, %cst_9 {dimension_numbers = #tpu.dot_dimension_numbers<[1], [0], [0], [1], [0, 0, 1, 1], [], []>} : vector<8x32xf32>, vector<32x128xf32>, vector<8x128xf32> -> vector<8x128xf32>
    %11 = arith.addf %9, %10 : vector<8x128xf32>
    %cst_10 = arith.constant 5.000000e-01 : f32
    %12 = vector.broadcast %cst_10 : f32 to vector<8x128xf32>
    %13 = arith.mulf %12, %11 : vector<8x128xf32>
    %14 = math.tanh %13 : vector<8x128xf32>
    %cst_11 = arith.constant 5.000000e-01 : f32
    %15 = vector.broadcast %cst_11 : f32 to vector<8x128xf32>
    %16 = arith.mulf %15, %14 : vector<8x128xf32>
    %cst_12 = arith.constant 5.000000e-01 : f32
    %17 = vector.broadcast %cst_12 : f32 to vector<8x128xf32>
    %18 = arith.addf %16, %17 : vector<8x128xf32>
    %19 = math.tanh %11 : vector<8x128xf32>
    %20 = vector.extract_strided_slice %18 {offsets = [0, 0], sizes = [8, 32], strides = [1, 1]} : vector<8x128xf32> to vector<8x32xf32>
    %21 = vector.extract_strided_slice %18 {offsets = [0, 32], sizes = [8, 32], strides = [1, 1]} : vector<8x128xf32> to vector<8x32xf32>
    %22 = vector.extract_strided_slice %19 {offsets = [0, 64], sizes = [8, 32], strides = [1, 1]} : vector<8x128xf32> to vector<8x32xf32>
    %23 = vector.extract_strided_slice %18 {offsets = [0, 96], sizes = [8, 32], strides = [1, 1]} : vector<8x128xf32> to vector<8x32xf32>
    %24 = arith.mulf %21, %8 : vector<8x32xf32>
    %25 = arith.mulf %20, %22 : vector<8x32xf32>
    %26 = arith.addf %24, %25 : vector<8x32xf32>
    %27 = math.tanh %26 : vector<8x32xf32>
    %28 = arith.mulf %23, %27 : vector<8x32xf32>
    %29 = vector.extract_strided_slice %5 {offsets = [8, 0], sizes = [8, 128], strides = [1, 1]} : vector<64x128xf32> to vector<8x128xf32>
    %cst_13 = arith.constant dense<0.000000e+00> : vector<8x128xf32>
    %30 = tpu.matmul %28, %6, %cst_13 {dimension_numbers = #tpu.dot_dimension_numbers<[1], [0], [0], [1], [0, 0, 1, 1], [], []>} : vector<8x32xf32>, vector<32x128xf32>, vector<8x128xf32> -> vector<8x128xf32>
    %31 = arith.addf %29, %30 : vector<8x128xf32>
    %cst_14 = arith.constant 5.000000e-01 : f32
    %32 = vector.broadcast %cst_14 : f32 to vector<8x128xf32>
    %33 = arith.mulf %32, %31 : vector<8x128xf32>
    %34 = math.tanh %33 : vector<8x128xf32>
    %cst_15 = arith.constant 5.000000e-01 : f32
    %35 = vector.broadcast %cst_15 : f32 to vector<8x128xf32>
    %36 = arith.mulf %35, %34 : vector<8x128xf32>
    %cst_16 = arith.constant 5.000000e-01 : f32
    %37 = vector.broadcast %cst_16 : f32 to vector<8x128xf32>
    %38 = arith.addf %36, %37 : vector<8x128xf32>
    %39 = math.tanh %31 : vector<8x128xf32>
    %40 = vector.extract_strided_slice %38 {offsets = [0, 0], sizes = [8, 32], strides = [1, 1]} : vector<8x128xf32> to vector<8x32xf32>
    %41 = vector.extract_strided_slice %38 {offsets = [0, 32], sizes = [8, 32], strides = [1, 1]} : vector<8x128xf32> to vector<8x32xf32>
    %42 = vector.extract_strided_slice %39 {offsets = [0, 64], sizes = [8, 32], strides = [1, 1]} : vector<8x128xf32> to vector<8x32xf32>
    %43 = vector.extract_strided_slice %38 {offsets = [0, 96], sizes = [8, 32], strides = [1, 1]} : vector<8x128xf32> to vector<8x32xf32>
    %44 = arith.mulf %41, %26 : vector<8x32xf32>
    %45 = arith.mulf %40, %42 : vector<8x32xf32>
    %46 = arith.addf %44, %45 : vector<8x32xf32>
    %47 = math.tanh %46 : vector<8x32xf32>
    %48 = arith.mulf %43, %47 : vector<8x32xf32>
    %49 = vector.extract_strided_slice %5 {offsets = [16, 0], sizes = [8, 128], strides = [1, 1]} : vector<64x128xf32> to vector<8x128xf32>
    %cst_17 = arith.constant dense<0.000000e+00> : vector<8x128xf32>
    %50 = tpu.matmul %48, %6, %cst_17 {dimension_numbers = #tpu.dot_dimension_numbers<[1], [0], [0], [1], [0, 0, 1, 1], [], []>} : vector<8x32xf32>, vector<32x128xf32>, vector<8x128xf32> -> vector<8x128xf32>
    %51 = arith.addf %49, %50 : vector<8x128xf32>
    %cst_18 = arith.constant 5.000000e-01 : f32
    %52 = vector.broadcast %cst_18 : f32 to vector<8x128xf32>
    %53 = arith.mulf %52, %51 : vector<8x128xf32>
    %54 = math.tanh %53 : vector<8x128xf32>
    %cst_19 = arith.constant 5.000000e-01 : f32
    %55 = vector.broadcast %cst_19 : f32 to vector<8x128xf32>
    %56 = arith.mulf %55, %54 : vector<8x128xf32>
    %cst_20 = arith.constant 5.000000e-01 : f32
    %57 = vector.broadcast %cst_20 : f32 to vector<8x128xf32>
    %58 = arith.addf %56, %57 : vector<8x128xf32>
    %59 = math.tanh %51 : vector<8x128xf32>
    %60 = vector.extract_strided_slice %58 {offsets = [0, 0], sizes = [8, 32], strides = [1, 1]} : vector<8x128xf32> to vector<8x32xf32>
    %61 = vector.extract_strided_slice %58 {offsets = [0, 32], sizes = [8, 32], strides = [1, 1]} : vector<8x128xf32> to vector<8x32xf32>
    %62 = vector.extract_strided_slice %59 {offsets = [0, 64], sizes = [8, 32], strides = [1, 1]} : vector<8x128xf32> to vector<8x32xf32>
    %63 = vector.extract_strided_slice %58 {offsets = [0, 96], sizes = [8, 32], strides = [1, 1]} : vector<8x128xf32> to vector<8x32xf32>
    %64 = arith.mulf %61, %46 : vector<8x32xf32>
    %65 = arith.mulf %60, %62 : vector<8x32xf32>
    %66 = arith.addf %64, %65 : vector<8x32xf32>
    %67 = math.tanh %66 : vector<8x32xf32>
    %68 = arith.mulf %63, %67 : vector<8x32xf32>
    %69 = vector.extract_strided_slice %5 {offsets = [24, 0], sizes = [8, 128], strides = [1, 1]} : vector<64x128xf32> to vector<8x128xf32>
    %cst_21 = arith.constant dense<0.000000e+00> : vector<8x128xf32>
    %70 = tpu.matmul %68, %6, %cst_21 {dimension_numbers = #tpu.dot_dimension_numbers<[1], [0], [0], [1], [0, 0, 1, 1], [], []>} : vector<8x32xf32>, vector<32x128xf32>, vector<8x128xf32> -> vector<8x128xf32>
    %71 = arith.addf %69, %70 : vector<8x128xf32>
    %cst_22 = arith.constant 5.000000e-01 : f32
    %72 = vector.broadcast %cst_22 : f32 to vector<8x128xf32>
    %73 = arith.mulf %72, %71 : vector<8x128xf32>
    %74 = math.tanh %73 : vector<8x128xf32>
    %cst_23 = arith.constant 5.000000e-01 : f32
    %75 = vector.broadcast %cst_23 : f32 to vector<8x128xf32>
    %76 = arith.mulf %75, %74 : vector<8x128xf32>
    %cst_24 = arith.constant 5.000000e-01 : f32
    %77 = vector.broadcast %cst_24 : f32 to vector<8x128xf32>
    %78 = arith.addf %76, %77 : vector<8x128xf32>
    %79 = math.tanh %71 : vector<8x128xf32>
    %80 = vector.extract_strided_slice %78 {offsets = [0, 0], sizes = [8, 32], strides = [1, 1]} : vector<8x128xf32> to vector<8x32xf32>
    %81 = vector.extract_strided_slice %78 {offsets = [0, 32], sizes = [8, 32], strides = [1, 1]} : vector<8x128xf32> to vector<8x32xf32>
    %82 = vector.extract_strided_slice %79 {offsets = [0, 64], sizes = [8, 32], strides = [1, 1]} : vector<8x128xf32> to vector<8x32xf32>
    %83 = vector.extract_strided_slice %78 {offsets = [0, 96], sizes = [8, 32], strides = [1, 1]} : vector<8x128xf32> to vector<8x32xf32>
    %84 = arith.mulf %81, %66 : vector<8x32xf32>
    %85 = arith.mulf %80, %82 : vector<8x32xf32>
    %86 = arith.addf %84, %85 : vector<8x32xf32>
    %87 = math.tanh %86 : vector<8x32xf32>
    %88 = arith.mulf %83, %87 : vector<8x32xf32>
    %89 = vector.extract_strided_slice %5 {offsets = [32, 0], sizes = [8, 128], strides = [1, 1]} : vector<64x128xf32> to vector<8x128xf32>
    %cst_25 = arith.constant dense<0.000000e+00> : vector<8x128xf32>
    %90 = tpu.matmul %88, %6, %cst_25 {dimension_numbers = #tpu.dot_dimension_numbers<[1], [0], [0], [1], [0, 0, 1, 1], [], []>} : vector<8x32xf32>, vector<32x128xf32>, vector<8x128xf32> -> vector<8x128xf32>
    %91 = arith.addf %89, %90 : vector<8x128xf32>
    %cst_26 = arith.constant 5.000000e-01 : f32
    %92 = vector.broadcast %cst_26 : f32 to vector<8x128xf32>
    %93 = arith.mulf %92, %91 : vector<8x128xf32>
    %94 = math.tanh %93 : vector<8x128xf32>
    %cst_27 = arith.constant 5.000000e-01 : f32
    %95 = vector.broadcast %cst_27 : f32 to vector<8x128xf32>
    %96 = arith.mulf %95, %94 : vector<8x128xf32>
    %cst_28 = arith.constant 5.000000e-01 : f32
    %97 = vector.broadcast %cst_28 : f32 to vector<8x128xf32>
    %98 = arith.addf %96, %97 : vector<8x128xf32>
    %99 = math.tanh %91 : vector<8x128xf32>
    %100 = vector.extract_strided_slice %98 {offsets = [0, 0], sizes = [8, 32], strides = [1, 1]} : vector<8x128xf32> to vector<8x32xf32>
    %101 = vector.extract_strided_slice %98 {offsets = [0, 32], sizes = [8, 32], strides = [1, 1]} : vector<8x128xf32> to vector<8x32xf32>
    %102 = vector.extract_strided_slice %99 {offsets = [0, 64], sizes = [8, 32], strides = [1, 1]} : vector<8x128xf32> to vector<8x32xf32>
    %103 = vector.extract_strided_slice %98 {offsets = [0, 96], sizes = [8, 32], strides = [1, 1]} : vector<8x128xf32> to vector<8x32xf32>
    %104 = arith.mulf %101, %86 : vector<8x32xf32>
    %105 = arith.mulf %100, %102 : vector<8x32xf32>
    %106 = arith.addf %104, %105 : vector<8x32xf32>
    %107 = math.tanh %106 : vector<8x32xf32>
    %108 = arith.mulf %103, %107 : vector<8x32xf32>
    %109 = vector.extract_strided_slice %5 {offsets = [40, 0], sizes = [8, 128], strides = [1, 1]} : vector<64x128xf32> to vector<8x128xf32>
    %cst_29 = arith.constant dense<0.000000e+00> : vector<8x128xf32>
    %110 = tpu.matmul %108, %6, %cst_29 {dimension_numbers = #tpu.dot_dimension_numbers<[1], [0], [0], [1], [0, 0, 1, 1], [], []>} : vector<8x32xf32>, vector<32x128xf32>, vector<8x128xf32> -> vector<8x128xf32>
    %111 = arith.addf %109, %110 : vector<8x128xf32>
    %cst_30 = arith.constant 5.000000e-01 : f32
    %112 = vector.broadcast %cst_30 : f32 to vector<8x128xf32>
    %113 = arith.mulf %112, %111 : vector<8x128xf32>
    %114 = math.tanh %113 : vector<8x128xf32>
    %cst_31 = arith.constant 5.000000e-01 : f32
    %115 = vector.broadcast %cst_31 : f32 to vector<8x128xf32>
    %116 = arith.mulf %115, %114 : vector<8x128xf32>
    %cst_32 = arith.constant 5.000000e-01 : f32
    %117 = vector.broadcast %cst_32 : f32 to vector<8x128xf32>
    %118 = arith.addf %116, %117 : vector<8x128xf32>
    %119 = math.tanh %111 : vector<8x128xf32>
    %120 = vector.extract_strided_slice %118 {offsets = [0, 0], sizes = [8, 32], strides = [1, 1]} : vector<8x128xf32> to vector<8x32xf32>
    %121 = vector.extract_strided_slice %118 {offsets = [0, 32], sizes = [8, 32], strides = [1, 1]} : vector<8x128xf32> to vector<8x32xf32>
    %122 = vector.extract_strided_slice %119 {offsets = [0, 64], sizes = [8, 32], strides = [1, 1]} : vector<8x128xf32> to vector<8x32xf32>
    %123 = vector.extract_strided_slice %118 {offsets = [0, 96], sizes = [8, 32], strides = [1, 1]} : vector<8x128xf32> to vector<8x32xf32>
    %124 = arith.mulf %121, %106 : vector<8x32xf32>
    %125 = arith.mulf %120, %122 : vector<8x32xf32>
    %126 = arith.addf %124, %125 : vector<8x32xf32>
    %127 = math.tanh %126 : vector<8x32xf32>
    %128 = arith.mulf %123, %127 : vector<8x32xf32>
    %129 = vector.extract_strided_slice %5 {offsets = [48, 0], sizes = [8, 128], strides = [1, 1]} : vector<64x128xf32> to vector<8x128xf32>
    %cst_33 = arith.constant dense<0.000000e+00> : vector<8x128xf32>
    %130 = tpu.matmul %128, %6, %cst_33 {dimension_numbers = #tpu.dot_dimension_numbers<[1], [0], [0], [1], [0, 0, 1, 1], [], []>} : vector<8x32xf32>, vector<32x128xf32>, vector<8x128xf32> -> vector<8x128xf32>
    %131 = arith.addf %129, %130 : vector<8x128xf32>
    %cst_34 = arith.constant 5.000000e-01 : f32
    %132 = vector.broadcast %cst_34 : f32 to vector<8x128xf32>
    %133 = arith.mulf %132, %131 : vector<8x128xf32>
    %134 = math.tanh %133 : vector<8x128xf32>
    %cst_35 = arith.constant 5.000000e-01 : f32
    %135 = vector.broadcast %cst_35 : f32 to vector<8x128xf32>
    %136 = arith.mulf %135, %134 : vector<8x128xf32>
    %cst_36 = arith.constant 5.000000e-01 : f32
    %137 = vector.broadcast %cst_36 : f32 to vector<8x128xf32>
    %138 = arith.addf %136, %137 : vector<8x128xf32>
    %139 = math.tanh %131 : vector<8x128xf32>
    %140 = vector.extract_strided_slice %138 {offsets = [0, 0], sizes = [8, 32], strides = [1, 1]} : vector<8x128xf32> to vector<8x32xf32>
    %141 = vector.extract_strided_slice %138 {offsets = [0, 32], sizes = [8, 32], strides = [1, 1]} : vector<8x128xf32> to vector<8x32xf32>
    %142 = vector.extract_strided_slice %139 {offsets = [0, 64], sizes = [8, 32], strides = [1, 1]} : vector<8x128xf32> to vector<8x32xf32>
    %143 = vector.extract_strided_slice %138 {offsets = [0, 96], sizes = [8, 32], strides = [1, 1]} : vector<8x128xf32> to vector<8x32xf32>
    %144 = arith.mulf %141, %126 : vector<8x32xf32>
    %145 = arith.mulf %140, %142 : vector<8x32xf32>
    %146 = arith.addf %144, %145 : vector<8x32xf32>
    %147 = math.tanh %146 : vector<8x32xf32>
    %148 = arith.mulf %143, %147 : vector<8x32xf32>
    %149 = vector.extract_strided_slice %5 {offsets = [56, 0], sizes = [8, 128], strides = [1, 1]} : vector<64x128xf32> to vector<8x128xf32>
    %cst_37 = arith.constant dense<0.000000e+00> : vector<8x128xf32>
    %150 = tpu.matmul %148, %6, %cst_37 {dimension_numbers = #tpu.dot_dimension_numbers<[1], [0], [0], [1], [0, 0, 1, 1], [], []>} : vector<8x32xf32>, vector<32x128xf32>, vector<8x128xf32> -> vector<8x128xf32>
    %151 = arith.addf %149, %150 : vector<8x128xf32>
    %cst_38 = arith.constant 5.000000e-01 : f32
    %152 = vector.broadcast %cst_38 : f32 to vector<8x128xf32>
    %153 = arith.mulf %152, %151 : vector<8x128xf32>
    %154 = math.tanh %153 : vector<8x128xf32>
    %cst_39 = arith.constant 5.000000e-01 : f32
    %155 = vector.broadcast %cst_39 : f32 to vector<8x128xf32>
    %156 = arith.mulf %155, %154 : vector<8x128xf32>
    %cst_40 = arith.constant 5.000000e-01 : f32
    %157 = vector.broadcast %cst_40 : f32 to vector<8x128xf32>
    %158 = arith.addf %156, %157 : vector<8x128xf32>
    %159 = math.tanh %151 : vector<8x128xf32>
    %160 = vector.extract_strided_slice %158 {offsets = [0, 0], sizes = [8, 32], strides = [1, 1]} : vector<8x128xf32> to vector<8x32xf32>
    %161 = vector.extract_strided_slice %158 {offsets = [0, 32], sizes = [8, 32], strides = [1, 1]} : vector<8x128xf32> to vector<8x32xf32>
    %162 = vector.extract_strided_slice %159 {offsets = [0, 64], sizes = [8, 32], strides = [1, 1]} : vector<8x128xf32> to vector<8x32xf32>
    %163 = vector.extract_strided_slice %158 {offsets = [0, 96], sizes = [8, 32], strides = [1, 1]} : vector<8x128xf32> to vector<8x32xf32>
    %164 = arith.mulf %161, %146 : vector<8x32xf32>
    %165 = arith.mulf %160, %162 : vector<8x32xf32>
    %166 = arith.addf %164, %165 : vector<8x32xf32>
    %167 = math.tanh %166 : vector<8x32xf32>
    %168 = arith.mulf %163, %167 : vector<8x32xf32>
    %169 = tpu.concatenate %28, %48, %68, %88, %108, %128, %148, %168 in 0 : vector<8x32xf32>, vector<8x32xf32>, vector<8x32xf32>, vector<8x32xf32>, vector<8x32xf32>, vector<8x32xf32>, vector<8x32xf32>, vector<8x32xf32> -> vector<64x32xf32>
    %170 = arith.truncf %169 : vector<64x32xf32> to vector<64x32xbf16>
    %c0_41 = arith.constant 0 : index
    %c0_42 = arith.constant 0 : index
    %171 = vector.load %arg4[%c0_41, %c0_42] : memref<32x1152xbf16, #tpu.memory_space<vmem>>, vector<32x1152xbf16>
    %cst_43 = arith.constant dense<0.000000e+00> : vector<64x1152xf32>
    %172 = tpu.matmul %170, %171, %cst_43 {dimension_numbers = #tpu.dot_dimension_numbers<[1], [0], [0], [1], [0, 0, 1, 1], [], []>} : vector<64x32xbf16>, vector<32x1152xbf16>, vector<64x1152xf32> -> vector<64x1152xf32>
    %c0_44 = arith.constant 0 : index
    %c0_45 = arith.constant 0 : index
    %173 = vector.load %arg5[%c0_44, %c0_45] : memref<1x1152xf32, #tpu.memory_space<vmem>>, vector<1x1152xf32>
    %174 = vector.broadcast %173 : vector<1x1152xf32> to vector<64x1152xf32>
    %175 = arith.addf %172, %174 : vector<64x1152xf32>
    %c0_46 = arith.constant 0 : index
    %c0_47 = arith.constant 0 : index
    %176 = vector.load %arg6[%c0_46, %c0_47] : memref<64x1152xf32, #tpu.memory_space<vmem>>, vector<64x1152xf32>
    tpu.vector_store %arg6[%c0_46, %c0_47], %175 {strides = array<i32>} : memref<64x1152xf32, #tpu.memory_space<vmem>>, vector<64x1152xf32>,
    return
  }
}

</mosaic_0001>

<llo_original>
// kernel: recurrent_predictor_forward.1
$region0: #{recurrent_predictor_forward.1}
  #allocation0 [shape = 'u32[]', space=smem, size = 0x4, offset = 0x4, fixed_abs, tag = 'smem constant byte address 0x4 - core index']
  #allocation1 [shape = 'u32[144,128]{1,0:T(1,128)}', space=vmem, size = 0x12000, scoped, tag = 'internal scratch']
  %s0 = inlined_call_operand.vmem [shape: bf16[64,16], index: 0, kind: input, shape index: {}]
  %s1 = inlined_call_operand.vmem [shape: bf16[16,128], index: 1, kind: input, shape index: {}]
  %s2 = inlined_call_operand.hbm [shape: f32[32,128], index: 2, kind: input, shape index: {}]
  %s3 = inlined_call_operand.vmem [shape: f32[1,128], index: 3, kind: input, shape index: {}]
  %s4 = inlined_call_operand.vmem [shape: bf16[32,1152], index: 4, kind: input, shape index: {}]
  %s5 = inlined_call_operand.vmem [shape: f32[1,1152], index: 5, kind: input, shape index: {}]
  %s6 = inlined_call_operand.vmem [shape: f32[64,1152], index: 6, kind: output, shape index: {}]
  %s7 = sld [smem:[#allocation0]]
  $region38: #{recurrent_predictor_forward.1} parent=0
    _
  %s9 = ssub.s32 1, %s7
  %s10 = scalar_select 0, %s9, %s7
  $region1: #{recurrent_predictor_forward.1} parent=0
    #allocation2 [shape = 'u8[16384]{0}', space=vmem, size = 0x4000, scoped, tag = 'input window, operand 2, single buffered']
    #allocation3 [shape = 's32[1]{0}', space=sflag, size = 0x4, scoped, tag = 'scoped memory for recurrent_predictor_forward.1']
    %11 = vsyncpa [#allocation3], 0
    // Predicated region
    $region2: #{recurrent_predictor_forward.1} parent=1 // pred_check
      _
    $region3: #{recurrent_predictor_forward.1} parent=1 // pred_check_branch
      %13 = sbr.rel (0) target = $region5
    $region4: #{recurrent_predictor_forward.1} parent=1 // pred_region
      _
    $region5: #{recurrent_predictor_forward.1} parent=1 // pred_fallthru
      _
    // Predicated region
    $region6: #{recurrent_predictor_forward.1} parent=1 // pred_check
      _
    $region7: #{recurrent_predictor_forward.1} parent=1 // pred_check_branch
      %15 = sbr.rel (0) target = $region9
    $region8: #{recurrent_predictor_forward.1} parent=1 // pred_region
      _
    $region9: #{recurrent_predictor_forward.1} parent=1 // pred_fallthru
      _
    // Predicated region
    $region10: #{recurrent_predictor_forward.1} parent=1 // pred_check
      _
    $region11: #{recurrent_predictor_forward.1} parent=1 // pred_check_branch
      %17 = sbr.rel (0) target = $region13
    $region12: #{recurrent_predictor_forward.1} parent=1 // pred_region
      %s19 = ssub.s32 512, 512
      %20 = vsyncadd [#allocation3], %s19
      %s21 = sshll.u32 [#allocation2], 4
      %s22 = int_to_ptr.vmem [resolvable:$true] %s21
      %27 = dma.hbm_to_vmem [thread:$0]  %s2, 512, %s22, [#allocation3], 128, 128, 8
    $region13: #{recurrent_predictor_forward.1} parent=1 // pred_fallthru
      _
    // Predicated region
    $region14: #{recurrent_predictor_forward.1} parent=1 // pred_check
      _
    $region15: #{recurrent_predictor_forward.1} parent=1 // pred_check_branch
      %29 = sbr.rel (0) target = $region17
    $region16: #{recurrent_predictor_forward.1} parent=1 // pred_region
      _
    $region17: #{recurrent_predictor_forward.1} parent=1 // pred_fallthru
      _
    // Predicated region
    $region18: #{recurrent_predictor_forward.1} parent=1 // pred_check
      _
    $region19: #{recurrent_predictor_forward.1} parent=1 // pred_check_branch
      %31 = sbr.rel (0) target = $region21
    $region20: #{recurrent_predictor_forward.1} parent=1 // pred_region
      _
    $region21: #{recurrent_predictor_forward.1} parent=1 // pred_fallthru
      _
    // Predicated region
    $region22: #{recurrent_predictor_forward.1} parent=1 // pred_check
      _
    $region23: #{recurrent_predictor_forward.1} parent=1 // pred_check_branch
      %33 = sbr.rel (0) target = $region25
    $region24: #{recurrent_predictor_forward.1} parent=1 // pred_region
      _
    $region25: #{recurrent_predictor_forward.1} parent=1 // pred_fallthru
      _
    // Predicated region
    $region26: #{recurrent_predictor_forward.1} parent=1 // pred_check
      _
    $region27: #{recurrent_predictor_forward.1} parent=1 // pred_check_branch
      %35 = sbr.rel (0) target = $region29
    $region28: #{recurrent_predictor_forward.1} parent=1 // pred_region
      %36 = dma.done [#allocation3], 512
    $region29: #{recurrent_predictor_forward.1} parent=1 // pred_fallthru
      _
    %v38 = vld [vmem:[%s0] sm:$0xf]
    %v39 = vld [vmem:[%s0 + $0x4] sm:$0xf]
    %v40 = vld [vmem:[%s0 + $0x8] sm:$0xf]
    %v41 = vld [vmem:[%s0 + $0xc] sm:$0xf]
    %v42 = vld [vmem:[%s0 + $0x10] sm:$0xf]
    %v43 = vld [vmem:[%s0 + $0x14] sm:$0xf]
    %v44 = vld [vmem:[%s0 + $0x18] sm:$0xf]
    %v45 = vld [vmem:[%s0 + $0x1c] sm:$0xf]
    %v46 = vld [vmem:[%s1] sm:$0xf]
    %v47 = vld [vmem:[%s1 + $0x4] sm:$0xf]
    %v48 = vld [vmem:[%s3] sm:$0x1]
    %v50 = vlaneseq
    %v51 = vshrl.u32 %v50, 7
    %v52 = vsub.s32 0, %v51
    %v53 = vrot.slane %v48, %v52
    %v63 = vunpack.c.l.b16 %v38
    %v64 = vunpack.c.l.b16 %v39
    %v65 = vunpack.c.l.b16 %v40
    %v66 = vunpack.c.l.b16 %v41
    %v67 = vunpack.c.l.b16 %v42
    %v68 = vunpack.c.l.b16 %v43
    %v69 = vunpack.c.l.b16 %v44
    %v70 = vunpack.c.l.b16 %v45
    %v71 = vpack.c.b16 %v64, %v63
    %v72 = vpack.c.b16 %v66, %v65
    %v73 = vpack.c.b16 %v68, %v67
    %v74 = vpack.c.b16 %v70, %v69
    %v77 = vunpack.c.l.b16 %v46
    %v78 = vunpack.c.l.b16 %v47
    %v79 = vpack.c.b16 %v78, %v77
    %vm81 = vcmask 130048
    %v83 = vsel %vm81, %v71, 0
    %v86 = vsel %vm81, %v72, 0
    %v89 = vsel %vm81, %v73, 0
    %v92 = vsel %vm81, %v74, 0
    %94 = vmatprep.subr.bf16.mxu0 0
    %95 = vmatpush1.bf16.msra.mxu0 %v79
    %96 = vmatprep.subr.bf16.mxu0 0
    %97 = vmatpush1.bf16.msra.mxu0 0
    %98 = vmatprep.subr.bf16.mxu0 0
    %99 = vmatpush1.bf16.msra.mxu0 0
    %100 = vmatprep.subr.bf16.mxu0 0
    %101 = vmatpush1.bf16.msra.mxu0 0
    %102 = vmatprep.subr.bf16.mxu0 0
    %103 = vmatpush1.bf16.msra.mxu0 0
    %104 = vmatprep.subr.bf16.mxu0 0
    %105 = vmatpush1.bf16.msra.mxu0 0
    %106 = vmatprep.subr.bf16.mxu0 0
    %107 = vmatpush1.bf16.msra.mxu0 0
    %108 = vmatprep.subr.bf16.mxu0 0
    %109 = vmatpush1.bf16.msra.mxu0 0
    %110 = vmatprep.subr.bf16.mxu0 0
    %111 = vmatpush1.bf16.msra.mxu0 0
    %112 = vmatprep.subr.bf16.mxu0 0
    %113 = vmatpush1.bf16.msra.mxu0 0
    %114 = vmatprep.subr.bf16.mxu0 0
    %115 = vmatpush1.bf16.msra.mxu0 0
    %116 = vmatprep.subr.bf16.mxu0 0
    %117 = vmatpush1.bf16.msra.mxu0 0
    %118 = vmatprep.subr.bf16.mxu0 0
    %119 = vmatpush1.bf16.msra.mxu0 0
    %120 = vmatprep.subr.bf16.mxu0 0
    %121 = vmatpush1.bf16.msra.mxu0 0
    %122 = vmatprep.subr.bf16.mxu0 0
    %123 = vmatpush1.bf16.msra.mxu0 0
    %124 = vmatprep.subr.bf16.mxu0 0
    %125 = vmatpush1.bf16.msra.mxu0 0
    %126 = vmatprep.mubr.bf16.mxu0 0
    %127 = vmatmul.mubr.bf16.gmra.mrb[0].mxu0 %v83
    %v128 = vpop.f32.mrb[0].mxu0
    %v129 = vadd.f32 %v53, %v128
    %v130 = vpop.f32.mrb[0].mxu0
    %v131 = vpop.f32.mrb[0].mxu0
    %v132 = vadd.f32 %v53, %v131
    %v133 = vpop.f32.mrb[0].mxu0
    %134 = vmatprep.mubr.bf16.mxu0 0
    %135 = vmatmul.mubr.bf16.gmra.mrb[0].mxu0 %v86
    %v136 = vpop.f32.mrb[0].mxu0
    %v137 = vadd.f32 %v53, %v136
    %v138 = vpop.f32.mrb[0].mxu0
    %v139 = vpop.f32.mrb[0].mxu0
    %v140 = vadd.f32 %v53, %v139
    %v141 = vpop.f32.mrb[0].mxu0
    %142 = vmatprep.mubr.bf16.mxu0 0
    %143 = vmatmul.mubr.bf16.gmra.mrb[0].mxu0 %v89
    %v144 = vpop.f32.mrb[0].mxu0
    %v145 = vadd.f32 %v53, %v144
    %v146 = vpop.f32.mrb[0].mxu0
    %v147 = vpop.f32.mrb[0].mxu0
    %v148 = vadd.f32 %v53, %v147
    %v149 = vpop.f32.mrb[0].mxu0
    %150 = vmatprep.mubr.bf16.mxu0 0
    %151 = vmatmul.mubr.bf16.gmra.mrb[0].mxu0 %v92
    %v152 = vpop.f32.mrb[0].mxu0
    %v153 = vadd.f32 %v53, %v152
    %v154 = vpop.f32.mrb[0].mxu0
    %v155 = vpop.f32.mrb[0].mxu0
    %v156 = vadd.f32 %v53, %v155
    %v157 = vpop.f32.mrb[0].mxu0
    %158 = vdwg.mxu0
    %v159 = vld [vmem:[#allocation2] sm:$0xff]
    %v160 = vld [vmem:[#allocation2 + $0x8] sm:$0xff]
    %v161 = vld [vmem:[#allocation2 + $0x10] sm:$0xff]
    %v162 = vld [vmem:[#allocation2 + $0x18] sm:$0xff]
    %vm163 = vcmask 261120
    %v165 = vsel %vm163, 0.0, 0
    %167 = vmatprep.subr.mxu0 0.0
    %168 = vmatpush1.msra.mxu0 %v159
    %169 = vmatprep.subr.mxu0 0.0
    %170 = vmatpush1.msra.mxu0 %v160
    %171 = vmatprep.subr.mxu0 0.0
    %172 = vmatpush1.msra.mxu0 %v161
    %173 = vmatprep.subr.mxu0 0.0
    %174 = vmatpush1.msra.mxu0 %v162
    %175 = vmatprep.subr.mxu0 0.0
    %176 = vmatpush1.msra.mxu0 0.0
    %177 = vmatprep.subr.mxu0 0.0
    %178 = vmatpush1.msra.mxu0 0.0
    %179 = vmatprep.subr.mxu0 0.0
    %180 = vmatpush1.msra.mxu0 0.0
    %181 = vmatprep.subr.mxu0 0.0
    %182 = vmatpush1.msra.mxu0 0.0
    %183 = vmatprep.subr.mxu0 0.0
    %184 = vmatpush1.msra.mxu0 0.0
    %185 = vmatprep.subr.mxu0 0.0
    %186 = vmatpush1.msra.mxu0 0.0
    %187 = vmatprep.subr.mxu0 0.0
    %188 = vmatpush1.msra.mxu0 0.0
    %189 = vmatprep.subr.mxu0 0.0
    %190 = vmatpush1.msra.mxu0 0.0
    %191 = vmatprep.subr.mxu0 0.0
    %192 = vmatpush1.msra.mxu0 0.0
    %193 = vmatprep.subr.mxu0 0.0
    %194 = vmatpush1.msra.mxu0 0.0
    %195 = vmatprep.subr.mxu0 0.0
    %196 = vmatpush1.msra.mxu0 0.0
    %197 = vmatprep.subr.mxu0 0.0
    %198 = vmatpush1.msra.mxu0 0.0
    %199 = vmatprep.subr.mxu0 0.0
    %200 = vmatpush1.msra.mxu0 0.0
    %201 = vmatprep.subr.mxu0 0.0
    %202 = vmatpush1.msra.mxu0 0.0
    %203 = vmatprep.subr.mxu0 0.0
    %204 = vmatpush1.msra.mxu0 0.0
    %205 = vmatprep.subr.mxu0 0.0
    %206 = vmatpush1.msra.mxu0 0.0
    %207 = vmatprep.subr.mxu0 0.0
    %208 = vmatpush1.msra.mxu0 0.0
    %209 = vmatprep.subr.mxu0 0.0
    %210 = vmatpush1.msra.mxu0 0.0
    %211 = vmatprep.subr.mxu0 0.0
    %212 = vmatpush1.msra.mxu0 0.0
    %213 = vmatprep.subr.mxu0 0.0
    %214 = vmatpush1.msra.mxu0 0.0
    %215 = vmatprep.subr.mxu0 0.0
    %216 = vmatpush1.msra.mxu0 0.0
    %217 = vmatprep.subr.mxu0 0.0
    %218 = vmatpush1.msra.mxu0 0.0
    %219 = vmatprep.subr.mxu0 0.0
    %220 = vmatpush1.msra.mxu0 0.0
    %221 = vmatprep.subr.mxu0 0.0
    %222 = vmatpush1.msra.mxu0 0.0
    %223 = vmatprep.subr.mxu0 0.0
    %224 = vmatpush1.msra.mxu0 0.0
    %225 = vmatprep.subr.mxu0 0.0
    %226 = vmatpush1.msra.mxu0 0.0
    %227 = vmatprep.subr.mxu0 0.0
    %228 = vmatpush1.msra.mxu0 0.0
    %229 = vmatprep.subr.mxu0 0.0
    %230 = vmatpush1.msra.mxu0 0.0
    %231 = vmatprep.mubr.f32.mxu0 0.0
    %232 = vmatmul.mubr.f32.gmra.mrb[0].mxu0 %v165
    %v233 = vpop.f32.mrb[0].mxu0
    %v234 = vadd.f32 0.0, %v233
    %v235 = vpop.f32.mrb[0].mxu0
    %236 = vdwg.mxu0
    %v237 = vadd.f32 %v129, %v234
    %v238 = vmul.f32 %v237, 0.5
    %v239 = vtanh.pop %v238
    %v240 = vmul.f32 %v239, 0.5
    %v241 = vadd.f32 %v240, 0.5
    %v242 = vtanh.pop %v237
    %v243 = vmul.f32 %v241, 0.0
    %245 = vrot.lane.b32.xlu0 %v242, 64
    %v246 = vpop.permute.xlu0 %245
    %v248 = vmul.f32 %v241, %v246
    %250 = vrot.lane.b32.xlu0 %v248, 32
    %v251 = vpop.permute.xlu0 %250
    %v253 = vadd.f32 %v243, %v251
    %v254 = vtanh.pop %v253
    %256 = vrot.lane.b32.xlu0 %v254, 64
    %v257 = vpop.permute.xlu0 %256
    %v259 = vmul.f32 %v241, %v257
    %261 = vrot.lane.b32.xlu0 %v259, 32
    %v262 = vpop.permute.xlu0 %261
    %v263 = vsel %vm163, %v262, 0
    %265 = vmatprep.subr.mxu0 0.0
    %266 = vmatpush1.msra.mxu0 %v159
    %267 = vmatprep.subr.mxu0 0.0
    %268 = vmatpush1.msra.mxu0 %v160
    %269 = vmatprep.subr.mxu0 0.0
    %270 = vmatpush1.msra.mxu0 %v161
    %271 = vmatprep.subr.mxu0 0.0
    %272 = vmatpush1.msra.mxu0 %v162
    %273 = vmatprep.subr.mxu0 0.0
    %274 = vmatpush1.msra.mxu0 0.0
    %275 = vmatprep.subr.mxu0 0.0
    %276 = vmatpush1.msra.mxu0 0.0
    %277 = vmatprep.subr.mxu0 0.0
    %278 = vmatpush1.msra.mxu0 0.0
    %279 = vmatprep.subr.mxu0 0.0
    %280 = vmatpush1.msra.mxu0 0.0
    %281 = vmatprep.subr.mxu0 0.0
    %282 = vmatpush1.msra.mxu0 0.0
    %283 = vmatprep.subr.mxu0 0.0
    %284 = vmatpush1.msra.mxu0 0.0
    %285 = vmatprep.subr.mxu0 0.0
    %286 = vmatpush1.msra.mxu0 0.0
    %287 = vmatprep.subr.mxu0 0.0
    %288 = vmatpush1.msra.mxu0 0.0
    %289 = vmatprep.subr.mxu0 0.0
    %290 = vmatpush1.msra.mxu0 0.0
    %291 = vmatprep.subr.mxu0 0.0
    %292 = vmatpush1.msra.mxu0 0.0
    %293 = vmatprep.subr.mxu0 0.0
    %294 = vmatpush1.msra.mxu0 0.0
    %295 = vmatprep.subr.mxu0 0.0
    %296 = vmatpush1.msra.mxu0 0.0
    %297 = vmatprep.subr.mxu0 0.0
    %298 = vmatpush1.msra.mxu0 0.0
    %299 = vmatprep.subr.mxu0 0.0
    %300 = vmatpush1.msra.mxu0 0.0
    %301 = vmatprep.subr.mxu0 0.0
    %302 = vmatpush1.msra.mxu0 0.0
    %303 = vmatprep.subr.mxu0 0.0
    %304 = vmatpush1.msra.mxu0 0.0
    %305 = vmatprep.subr.mxu0 0.0
    %306 = vmatpush1.msra.mxu0 0.0
    %307 = vmatprep.subr.mxu0 0.0
    %308 = vmatpush1.msra.mxu0 0.0
    %309 = vmatprep.subr.mxu0 0.0
    %310 = vmatpush1.msra.mxu0 0.0
    %311 = vmatprep.subr.mxu0 0.0
    %312 = vmatpush1.msra.mxu0 0.0
    %313 = vmatprep.subr.mxu0 0.0
    %314 = vmatpush1.msra.mxu0 0.0
    %315 = vmatprep.subr.mxu0 0.0
    %316 = vmatpush1.msra.mxu0 0.0
    %317 = vmatprep.subr.mxu0 0.0
    %318 = vmatpush1.msra.mxu0 0.0
    %319 = vmatprep.subr.mxu0 0.0
    %320 = vmatpush1.msra.mxu0 0.0
    %321 = vmatprep.subr.mxu0 0.0
    %322 = vmatpush1.msra.mxu0 0.0
    %323 = vmatprep.subr.mxu0 0.0
    %324 = vmatpush1.msra.mxu0 0.0
    %325 = vmatprep.subr.mxu0 0.0
    %326 = vmatpush1.msra.mxu0 0.0
    %327 = vmatprep.subr.mxu0 0.0
    %328 = vmatpush1.msra.mxu0 0.0
    %329 = vmatprep.mubr.f32.mxu0 0.0
    %330 = vmatmul.mubr.f32.gmra.mrb[0].mxu0 %v263
    %v331 = vpop.f32.mrb[0].mxu0
    %v332 = vadd.f32 0.0, %v331
    %v333 = vpop.f32.mrb[0].mxu0
    %334 = vdwg.mxu0
    %v335 = vadd.f32 %v132, %v332
    %v336 = vmul.f32 %v335, 0.5
    %v337 = vtanh.pop %v336
    %v338 = vmul.f32 %v337, 0.5
    %v339 = vadd.f32 %v338, 0.5
    %v340 = vtanh.pop %v335
    %v341 = vmul.f32 %v339, %v253
    %343 = vrot.lane.b32.xlu0 %v340, 64
    %v344 = vpop.permute.xlu0 %343
    %v346 = vmul.f32 %v339, %v344
    %348 = vrot.lane.b32.xlu0 %v346, 32
    %v349 = vpop.permute.xlu0 %348
    %v351 = vadd.f32 %v341, %v349
    %v352 = vtanh.pop %v351
    %354 = vrot.lane.b32.xlu0 %v352, 64
    %v355 = vpop.permute.xlu0 %354
    %v357 = vmul.f32 %v339, %v355
    %359 = vrot.lane.b32.xlu0 %v357, 32
    %v360 = vpop.permute.xlu0 %359
    %v361 = vsel %vm163, %v360, 0
    %363 = vmatprep.subr.mxu0 0.0
    %364 = vmatpush1.msra.mxu0 %v159
    %365 = vmatprep.subr.mxu0 0.0
    %366 = vmatpush1.msra.mxu0 %v160
    %367 = vmatprep.subr.mxu0 0.0
    %368 = vmatpush1.msra.mxu0 %v161
    %369 = vmatprep.subr.mxu0 0.0
    %370 = vmatpush1.msra.mxu0 %v162
    %371 = vmatprep.subr.mxu0 0.0
    %372 = vmatpush1.msra.mxu0 0.0
    %373 = vmatprep.subr.mxu0 0.0
    %374 = vmatpush1.msra.mxu0 0.0
    %375 = vmatprep.subr.mxu0 0.0
    %376 = vmatpush1.msra.mxu0 0.0
    %377 = vmatprep.subr.mxu0 0.0
    %378 = vmatpush1.msra.mxu0 0.0
    %379 = vmatprep.subr.mxu0 0.0
    %380 = vmatpush1.msra.mxu0 0.0
    %381 = vmatprep.subr.mxu0 0.0
    %382 = vmatpush1.msra.mxu0 0.0
    %383 = vmatprep.subr.mxu0 0.0
    %384 = vmatpush1.msra.mxu0 0.0
    %385 = vmatprep.subr.mxu0 0.0
    %386 = vmatpush1.msra.mxu0 0.0
    %387 = vmatprep.subr.mxu0 0.0
    %388 = vmatpush1.msra.mxu0 0.0
    %389 = vmatprep.subr.mxu0 0.0
    %390 = vmatpush1.msra.mxu0 0.0
    %391 = vmatprep.subr.mxu0 0.0
    %392 = vmatpush1.msra.mxu0 0.0
    %393 = vmatprep.subr.mxu0 0.0
    %394 = vmatpush1.msra.mxu0 0.0
    %395 = vmatprep.subr.mxu0 0.0
    %396 = vmatpush1.msra.mxu0 0.0
    %397 = vmatprep.subr.mxu0 0.0
    %398 = vmatpush1.msra.mxu0 0.0
    %399 = vmatprep.subr.mxu0 0.0
    %400 = vmatpush1.msra.mxu0 0.0
    %401 = vmatprep.subr.mxu0 0.0
    %402 = vmatpush1.msra.mxu0 0.0
    %403 = vmatprep.subr.mxu0 0.0
    %404 = vmatpush1.msra.mxu0 0.0
    %405 = vmatprep.subr.mxu0 0.0
    %406 = vmatpush1.msra.mxu0 0.0
    %407 = vmatprep.subr.mxu0 0.0
    %408 = vmatpush1.msra.mxu0 0.0
    %409 = vmatprep.subr.mxu0 0.0
    %410 = vmatpush1.msra.mxu0 0.0
    %411 = vmatprep.subr.mxu0 0.0
    %412 = vmatpush1.msra.mxu0 0.0
    %413 = vmatprep.subr.mxu0 0.0
    %414 = vmatpush1.msra.mxu0 0.0
    %415 = vmatprep.subr.mxu0 0.0
    %416 = vmatpush1.msra.mxu0 0.0
    %417 = vmatprep.subr.mxu0 0.0
    %418 = vmatpush1.msra.mxu0 0.0
    %419 = vmatprep.subr.mxu0 0.0
    %420 = vmatpush1.msra.mxu0 0.0
    %421 = vmatprep.subr.mxu0 0.0
    %422 = vmatpush1.msra.mxu0 0.0
    %423 = vmatprep.subr.mxu0 0.0
    %424 = vmatpush1.msra.mxu0 0.0
    %425 = vmatprep.subr.mxu0 0.0
    %426 = vmatpush1.msra.mxu0 0.0
    %427 = vmatprep.mubr.f32.mxu0 0.0
    %428 = vmatmul.mubr.f32.gmra.mrb[0].mxu0 %v361
    %v429 = vpop.f32.mrb[0].mxu0
    %v430 = vadd.f32 0.0, %v429
    %v431 = vpop.f32.mrb[0].mxu0
    %432 = vdwg.mxu0
    %v433 = vadd.f32 %v137, %v430
    %v434 = vmul.f32 %v433, 0.5
    %v435 = vtanh.pop %v434
    %v436 = vmul.f32 %v435, 0.5
    %v437 = vadd.f32 %v436, 0.5
    %v438 = vtanh.pop %v433
    %v439 = vmul.f32 %v437, %v351
    %441 = vrot.lane.b32.xlu0 %v438, 64
    %v442 = vpop.permute.xlu0 %441
    %v444 = vmul.f32 %v437, %v442
    %446 = vrot.lane.b32.xlu0 %v444, 32
    %v447 = vpop.permute.xlu0 %446
    %v449 = vadd.f32 %v439, %v447
    %v450 = vtanh.pop %v449
    %452 = vrot.lane.b32.xlu0 %v450, 64
    %v453 = vpop.permute.xlu0 %452
    %v455 = vmul.f32 %v437, %v453
    %457 = vrot.lane.b32.xlu0 %v455, 32
    %v458 = vpop.permute.xlu0 %457
    %v459 = vsel %vm163, %v458, 0
    %461 = vmatprep.subr.mxu0 0.0
    %462 = vmatpush1.msra.mxu0 %v159
    %463 = vmatprep.subr.mxu0 0.0
    %464 = vmatpush1.msra.mxu0 %v160
    %465 = vmatprep.subr.mxu0 0.0
    %466 = vmatpush1.msra.mxu0 %v161
    %467 = vmatprep.subr.mxu0 0.0
    %468 = vmatpush1.msra.mxu0 %v162
    %469 = vmatprep.subr.mxu0 0.0
    %470 = vmatpush1.msra.mxu0 0.0
    %471 = vmatprep.subr.mxu0 0.0
    %472 = vmatpush1.msra.mxu0 0.0
    %473 = vmatprep.subr.mxu0 0.0
    %474 = vmatpush1.msra.mxu0 0.0
    %475 = vmatprep.subr.mxu0 0.0
    %476 = vmatpush1.msra.mxu0 0.0
    %477 = vmatprep.subr.mxu0 0.0
    %478 = vmatpush1.msra.mxu0 0.0
    %479 = vmatprep.subr.mxu0 0.0
    %480 = vmatpush1.msra.mxu0 0.0
    %481 = vmatprep.subr.mxu0 0.0
    %482 = vmatpush1.msra.mxu0 0.0
    %483 = vmatprep.subr.mxu0 0.0
    %484 = vmatpush1.msra.mxu0 0.0
    %485 = vmatprep.subr.mxu0 0.0
    %486 = vmatpush1.msra.mxu0 0.0
    %487 = vmatprep.subr.mxu0 0.0
    %488 = vmatpush1.msra.mxu0 0.0
    %489 = vmatprep.subr.mxu0 0.0
    %490 = vmatpush1.msra.mxu0 0.0
    %491 = vmatprep.subr.mxu0 0.0
    %492 = vmatpush1.msra.mxu0 0.0
    %493 = vmatprep.subr.mxu0 0.0
    %494 = vmatpush1.msra.mxu0 0.0
    %495 = vmatprep.subr.mxu0 0.0
    %496 = vmatpush1.msra.mxu0 0.0
    %497 = vmatprep.subr.mxu0 0.0
    %498 = vmatpush1.msra.mxu0 0.0
    %499 = vmatprep.subr.mxu0 0.0
    %500 = vmatpush1.msra.mxu0 0.0
    %501 = vmatprep.subr.mxu0 0.0
    %502 = vmatpush1.msra.mxu0 0.0
    %503 = vmatprep.subr.mxu0 0.0
    %504 = vmatpush1.msra.mxu0 0.0
    %505 = vmatprep.subr.mxu0 0.0
    %506 = vmatpush1.msra.mxu0 0.0
    %507 = vmatprep.subr.mxu0 0.0
    %508 = vmatpush1.msra.mxu0 0.0
    %509 = vmatprep.subr.mxu0 0.0
    %510 = vmatpush1.msra.mxu0 0.0
    %511 = vmatprep.subr.mxu0 0.0
    %512 = vmatpush1.msra.mxu0 0.0
    %513 = vmatprep.subr.mxu0 0.0
    %514 = vmatpush1.msra.mxu0 0.0
    %515 = vmatprep.subr.mxu0 0.0
    %516 = vmatpush1.msra.mxu0 0.0
    %517 = vmatprep.subr.mxu0 0.0
    %518 = vmatpush1.msra.mxu0 0.0
    %519 = vmatprep.subr.mxu0 0.0
    %520 = vmatpush1.msra.mxu0 0.0
    %521 = vmatprep.subr.mxu0 0.0
    %522 = vmatpush1.msra.mxu0 0.0
    %523 = vmatprep.subr.mxu0 0.0
    %524 = vmatpush1.msra.mxu0 0.0
    %525 = vmatprep.mubr.f32.mxu0 0.0
    %526 = vmatmul.mubr.f32.gmra.mrb[0].mxu0 %v459
    %v527 = vpop.f32.mrb[0].mxu0
    %v528 = vadd.f32 0.0, %v527
    %v529 = vpop.f32.mrb[0].mxu0
    %530 = vdwg.mxu0
    %v531 = vadd.f32 %v140, %v528
    %v532 = vmul.f32 %v531, 0.5
    %v533 = vtanh.pop %v532
    %v534 = vmul.f32 %v533, 0.5
    %v535 = vadd.f32 %v534, 0.5
    %v536 = vtanh.pop %v531
    %v537 = vmul.f32 %v535, %v449
    %539 = vrot.lane.b32.xlu0 %v536, 64
    %v540 = vpop.permute.xlu0 %539
    %v542 = vmul.f32 %v535, %v540
    %544 = vrot.lane.b32.xlu0 %v542, 32
    %v545 = vpop.permute.xlu0 %544
    %v547 = vadd.f32 %v537, %v545
    %v548 = vtanh.pop %v547
    %550 = vrot.lane.b32.xlu0 %v548, 64
    %v551 = vpop.permute.xlu0 %550
    %v553 = vmul.f32 %v535, %v551
    %555 = vrot.lane.b32.xlu0 %v553, 32
    %v556 = vpop.permute.xlu0 %555
    %v557 = vsel %vm163, %v556, 0
    %559 = vmatprep.subr.mxu0 0.0
    %560 = vmatpush1.msra.mxu0 %v159
    %561 = vmatprep.subr.mxu0 0.0
    %562 = vmatpush1.msra.mxu0 %v160
    %563 = vmatprep.subr.mxu0 0.0
    %564 = vmatpush1.msra.mxu0 %v161
    %565 = vmatprep.subr.mxu0 0.0
    %566 = vmatpush1.msra.mxu0 %v162
    %567 = vmatprep.subr.mxu0 0.0
    %568 = vmatpush1.msra.mxu0 0.0
    %569 = vmatprep.subr.mxu0 0.0
    %570 = vmatpush1.msra.mxu0 0.0
    %571 = vmatprep.subr.mxu0 0.0
    %572 = vmatpush1.msra.mxu0 0.0
    %573 = vmatprep.subr.mxu0 0.0
    %574 = vmatpush1.msra.mxu0 0.0
    %575 = vmatprep.subr.mxu0 0.0
    %576 = vmatpush1.msra.mxu0 0.0
    %577 = vmatprep.subr.mxu0 0.0
    %578 = vmatpush1.msra.mxu0 0.0
    %579 = vmatprep.subr.mxu0 0.0
    %580 = vmatpush1.msra.mxu0 0.0
    %581 = vmatprep.subr.mxu0 0.0
    %582 = vmatpush1.msra.mxu0 0.0
    %583 = vmatprep.subr.mxu0 0.0
    %584 = vmatpush1.msra.mxu0 0.0
    %585 = vmatprep.subr.mxu0 0.0
    %586 = vmatpush1.msra.mxu0 0.0
    %587 = vmatprep.subr.mxu0 0.0
    %588 = vmatpush1.msra.mxu0 0.0
    %589 = vmatprep.subr.mxu0 0.0
    %590 = vmatpush1.msra.mxu0 0.0
    %591 = vmatprep.subr.mxu0 0.0
    %592 = vmatpush1.msra.mxu0 0.0
    %593 = vmatprep.subr.mxu0 0.0
    %594 = vmatpush1.msra.mxu0 0.0
    %595 = vmatprep.subr.mxu0 0.0
    %596 = vmatpush1.msra.mxu0 0.0
    %597 = vmatprep.subr.mxu0 0.0
    %598 = vmatpush1.msra.mxu0 0.0
    %599 = vmatprep.subr.mxu0 0.0
    %600 = vmatpush1.msra.mxu0 0.0
    %601 = vmatprep.subr.mxu0 0.0
    %602 = vmatpush1.msra.mxu0 0.0
    %603 = vmatprep.subr.mxu0 0.0
    %604 = vmatpush1.msra.mxu0 0.0
    %605 = vmatprep.subr.mxu0 0.0
    %606 = vmatpush1.msra.mxu0 0.0
    %607 = vmatprep.subr.mxu0 0.0
    %608 = vmatpush1.msra.mxu0 0.0
    %609 = vmatprep.subr.mxu0 0.0
    %610 = vmatpush1.msra.mxu0 0.0
    %611 = vmatprep.subr.mxu0 0.0
    %612 = vmatpush1.msra.mxu0 0.0
    %613 = vmatprep.subr.mxu0 0.0
    %614 = vmatpush1.msra.mxu0 0.0
    %615 = vmatprep.subr.mxu0 0.0
    %616 = vmatpush1.msra.mxu0 0.0
    %617 = vmatprep.subr.mxu0 0.0
    %618 = vmatpush1.msra.mxu0 0.0
    %619 = vmatprep.subr.mxu0 0.0
    %620 = vmatpush1.msra.mxu0 0.0
    %621 = vmatprep.subr.mxu0 0.0
    %622 = vmatpush1.msra.mxu0 0.0
    %623 = vmatprep.mubr.f32.mxu0 0.0
    %624 = vmatmul.mubr.f32.gmra.mrb[0].mxu0 %v557
    %v625 = vpop.f32.mrb[0].mxu0
    %v626 = vadd.f32 0.0, %v625
    %v627 = vpop.f32.mrb[0].mxu0
    %628 = vdwg.mxu0
    %v629 = vadd.f32 %v145, %v626
    %v630 = vmul.f32 %v629, 0.5
    %v631 = vtanh.pop %v630
    %v632 = vmul.f32 %v631, 0.5
    %v633 = vadd.f32 %v632, 0.5
    %v634 = vtanh.pop %v629
    %v635 = vmul.f32 %v633, %v547
    %637 = vrot.lane.b32.xlu0 %v634, 64
    %v638 = vpop.permute.xlu0 %637
    %v640 = vmul.f32 %v633, %v638
    %642 = vrot.lane.b32.xlu0 %v640, 32
    %v643 = vpop.permute.xlu0 %642
    %v645 = vadd.f32 %v635, %v643
    %v646 = vtanh.pop %v645
    %648 = vrot.lane.b32.xlu0 %v646, 64
    %v649 = vpop.permute.xlu0 %648
    %v651 = vmul.f32 %v633, %v649
    %653 = vrot.lane.b32.xlu0 %v651, 32
    %v654 = vpop.permute.xlu0 %653
    %v655 = vsel %vm163, %v654, 0
    %657 = vmatprep.subr.mxu0 0.0
    %658 = vmatpush1.msra.mxu0 %v159
    %659 = vmatprep.subr.mxu0 0.0
    %660 = vmatpush1.msra.mxu0 %v160
    %661 = vmatprep.subr.mxu0 0.0
    %662 = vmatpush1.msra.mxu0 %v161
    %663 = vmatprep.subr.mxu0 0.0
    %664 = vmatpush1.msra.mxu0 %v162
    %665 = vmatprep.subr.mxu0 0.0
    %666 = vmatpush1.msra.mxu0 0.0
    %667 = vmatprep.subr.mxu0 0.0
    %668 = vmatpush1.msra.mxu0 0.0
    %669 = vmatprep.subr.mxu0 0.0
    %670 = vmatpush1.msra.mxu0 0.0
    %671 = vmatprep.subr.mxu0 0.0
    %672 = vmatpush1.msra.mxu0 0.0
    %673 = vmatprep.subr.mxu0 0.0
    %674 = vmatpush1.msra.mxu0 0.0
    %675 = vmatprep.subr.mxu0 0.0
    %676 = vmatpush1.msra.mxu0 0.0
    %677 = vmatprep.subr.mxu0 0.0
    %678 = vmatpush1.msra.mxu0 0.0
    %679 = vmatprep.subr.mxu0 0.0
    %680 = vmatpush1.msra.mxu0 0.0
    %681 = vmatprep.subr.mxu0 0.0
    %682 = vmatpush1.msra.mxu0 0.0
    %683 = vmatprep.subr.mxu0 0.0
    %684 = vmatpush1.msra.mxu0 0.0
    %685 = vmatprep.subr.mxu0 0.0
    %686 = vmatpush1.msra.mxu0 0.0
    %687 = vmatprep.subr.mxu0 0.0
    %688 = vmatpush1.msra.mxu0 0.0
    %689 = vmatprep.subr.mxu0 0.0
    %690 = vmatpush1.msra.mxu0 0.0
    %691 = vmatprep.subr.mxu0 0.0
    %692 = vmatpush1.msra.mxu0 0.0
    %693 = vmatprep.subr.mxu0 0.0
    %694 = vmatpush1.msra.mxu0 0.0
    %695 = vmatprep.subr.mxu0 0.0
    %696 = vmatpush1.msra.mxu0 0.0
    %697 = vmatprep.subr.mxu0 0.0
    %698 = vmatpush1.msra.mxu0 0.0
    %699 = vmatprep.subr.mxu0 0.0
    %700 = vmatpush1.msra.mxu0 0.0
    %701 = vmatprep.subr.mxu0 0.0
    %702 = vmatpush1.msra.mxu0 0.0
    %703 = vmatprep.subr.mxu0 0.0
    %704 = vmatpush1.msra.mxu0 0.0
    %705 = vmatprep.subr.mxu0 0.0
    %706 = vmatpush1.msra.mxu0 0.0
    %707 = vmatprep.subr.mxu0 0.0
    %708 = vmatpush1.msra.mxu0 0.0
    %709 = vmatprep.subr.mxu0 0.0
    %710 = vmatpush1.msra.mxu0 0.0
    %711 = vmatprep.subr.mxu0 0.0
    %712 = vmatpush1.msra.mxu0 0.0
    %713 = vmatprep.subr.mxu0 0.0
    %714 = vmatpush1.msra.mxu0 0.0
    %715 = vmatprep.subr.mxu0 0.0
    %716 = vmatpush1.msra.mxu0 0.0
    %717 = vmatprep.subr.mxu0 0.0
    %718 = vmatpush1.msra.mxu0 0.0
    %719 = vmatprep.subr.mxu0 0.0
    %720 = vmatpush1.msra.mxu0 0.0
    %721 = vmatprep.mubr.f32.mxu0 0.0
    %722 = vmatmul.mubr.f32.gmra.mrb[0].mxu0 %v655
    %v723 = vpop.f32.mrb[0].mxu0
    %v724 = vadd.f32 0.0, %v723
    %v725 = vpop.f32.mrb[0].mxu0
    %726 = vdwg.mxu0
    %v727 = vadd.f32 %v148, %v724
    %v728 = vmul.f32 %v727, 0.5
    %v729 = vtanh.pop %v728
    %v730 = vmul.f32 %v729, 0.5
    %v731 = vadd.f32 %v730, 0.5
    %v732 = vtanh.pop %v727
    %v733 = vmul.f32 %v731, %v645
    %735 = vrot.lane.b32.xlu0 %v732, 64
    %v736 = vpop.permute.xlu0 %735
    %v738 = vmul.f32 %v731, %v736
    %740 = vrot.lane.b32.xlu0 %v738, 32
    %v741 = vpop.permute.xlu0 %740
    %v743 = vadd.f32 %v733, %v741
    %v744 = vtanh.pop %v743
    %746 = vrot.lane.b32.xlu0 %v744, 64
    %v747 = vpop.permute.xlu0 %746
    %v749 = vmul.f32 %v731, %v747
    %751 = vrot.lane.b32.xlu0 %v749, 32
    %v752 = vpop.permute.xlu0 %751
    %v753 = vsel %vm163, %v752, 0
    %755 = vmatprep.subr.mxu0 0.0
    %756 = vmatpush1.msra.mxu0 %v159
    %757 = vmatprep.subr.mxu0 0.0
    %758 = vmatpush1.msra.mxu0 %v160
    %759 = vmatprep.subr.mxu0 0.0
    %760 = vmatpush1.msra.mxu0 %v161
    %761 = vmatprep.subr.mxu0 0.0
    %762 = vmatpush1.msra.mxu0 %v162
    %763 = vmatprep.subr.mxu0 0.0
    %764 = vmatpush1.msra.mxu0 0.0
    %765 = vmatprep.subr.mxu0 0.0
    %766 = vmatpush1.msra.mxu0 0.0
    %767 = vmatprep.subr.mxu0 0.0
    %768 = vmatpush1.msra.mxu0 0.0
    %769 = vmatprep.subr.mxu0 0.0
    %770 = vmatpush1.msra.mxu0 0.0
    %771 = vmatprep.subr.mxu0 0.0
    %772 = vmatpush1.msra.mxu0 0.0
    %773 = vmatprep.subr.mxu0 0.0
    %774 = vmatpush1.msra.mxu0 0.0
    %775 = vmatprep.subr.mxu0 0.0
    %776 = vmatpush1.msra.mxu0 0.0
    %777 = vmatprep.subr.mxu0 0.0
    %778 = vmatpush1.msra.mxu0 0.0
    %779 = vmatprep.subr.mxu0 0.0
    %780 = vmatpush1.msra.mxu0 0.0
    %781 = vmatprep.subr.mxu0 0.0
    %782 = vmatpush1.msra.mxu0 0.0
    %783 = vmatprep.subr.mxu0 0.0
    %784 = vmatpush1.msra.mxu0 0.0
    %785 = vmatprep.subr.mxu0 0.0
    %786 = vmatpush1.msra.mxu0 0.0
    %787 = vmatprep.subr.mxu0 0.0
    %788 = vmatpush1.msra.mxu0 0.0
    %789 = vmatprep.subr.mxu0 0.0
    %790 = vmatpush1.msra.mxu0 0.0
    %791 = vmatprep.subr.mxu0 0.0
    %792 = vmatpush1.msra.mxu0 0.0
    %793 = vmatprep.subr.mxu0 0.0
    %794 = vmatpush1.msra.mxu0 0.0
    %795 = vmatprep.subr.mxu0 0.0
    %796 = vmatpush1.msra.mxu0 0.0
    %797 = vmatprep.subr.mxu0 0.0
    %798 = vmatpush1.msra.mxu0 0.0
    %799 = vmatprep.subr.mxu0 0.0
    %800 = vmatpush1.msra.mxu0 0.0
    %801 = vmatprep.subr.mxu0 0.0
    %802 = vmatpush1.msra.mxu0 0.0
    %803 = vmatprep.subr.mxu0 0.0
    %804 = vmatpush1.msra.mxu0 0.0
    %805 = vmatprep.subr.mxu0 0.0
    %806 = vmatpush1.msra.mxu0 0.0
    %807 = vmatprep.subr.mxu0 0.0
    %808 = vmatpush1.msra.mxu0 0.0
    %809 = vmatprep.subr.mxu0 0.0
    %810 = vmatpush1.msra.mxu0 0.0
    %811 = vmatprep.subr.mxu0 0.0
    %812 = vmatpush1.msra.mxu0 0.0
    %813 = vmatprep.subr.mxu0 0.0
    %814 = vmatpush1.msra.mxu0 0.0
    %815 = vmatprep.subr.mxu0 0.0
    %816 = vmatpush1.msra.mxu0 0.0
    %817 = vmatprep.subr.mxu0 0.0
    %818 = vmatpush1.msra.mxu0 0.0
    %819 = vmatprep.mubr.f32.mxu0 0.0
    %820 = vmatmul.mubr.f32.gmra.mrb[0].mxu0 %v753
    %v821 = vpop.f32.mrb[0].mxu0
    %v822 = vadd.f32 0.0, %v821
    %v823 = vpop.f32.mrb[0].mxu0
    %824 = vdwg.mxu0
    %v825 = vadd.f32 %v153, %v822
    %v826 = vmul.f32 %v825, 0.5
    %v827 = vtanh.pop %v826
    %v828 = vmul.f32 %v827, 0.5
    %v829 = vadd.f32 %v828, 0.5
    %v830 = vtanh.pop %v825
    %v831 = vmul.f32 %v829, %v743
    %833 = vrot.lane.b32.xlu0 %v830, 64
    %v834 = vpop.permute.xlu0 %833
    %v836 = vmul.f32 %v829, %v834
    %838 = vrot.lane.b32.xlu0 %v836, 32
    %v839 = vpop.permute.xlu0 %838
    %v841 = vadd.f32 %v831, %v839
    %v842 = vtanh.pop %v841
    %844 = vrot.lane.b32.xlu0 %v842, 64
    %v845 = vpop.permute.xlu0 %844
    %v847 = vmul.f32 %v829, %v845
    %849 = vrot.lane.b32.xlu0 %v847, 32
    %v850 = vpop.permute.xlu0 %849
    %v851 = vsel %vm163, %v850, 0
    %853 = vmatprep.subr.mxu0 0.0
    %854 = vmatpush1.msra.mxu0 %v159
    %855 = vmatprep.subr.mxu0 0.0
    %856 = vmatpush1.msra.mxu0 %v160
    %857 = vmatprep.subr.mxu0 0.0
    %858 = vmatpush1.msra.mxu0 %v161
    %859 = vmatprep.subr.mxu0 0.0
    %860 = vmatpush1.msra.mxu0 %v162
    %861 = vmatprep.subr.mxu0 0.0
    %862 = vmatpush1.msra.mxu0 0.0
    %863 = vmatprep.subr.mxu0 0.0
    %864 = vmatpush1.msra.mxu0 0.0
    %865 = vmatprep.subr.mxu0 0.0
    %866 = vmatpush1.msra.mxu0 0.0
    %867 = vmatprep.subr.mxu0 0.0
    %868 = vmatpush1.msra.mxu0 0.0
    %869 = vmatprep.subr.mxu0 0.0
    %870 = vmatpush1.msra.mxu0 0.0
    %871 = vmatprep.subr.mxu0 0.0
    %872 = vmatpush1.msra.mxu0 0.0
    %873 = vmatprep.subr.mxu0 0.0
    %874 = vmatpush1.msra.mxu0 0.0
    %875 = vmatprep.subr.mxu0 0.0
    %876 = vmatpush1.msra.mxu0 0.0
    %877 = vmatprep.subr.mxu0 0.0
    %878 = vmatpush1.msra.mxu0 0.0
    %879 = vmatprep.subr.mxu0 0.0
    %880 = vmatpush1.msra.mxu0 0.0
    %881 = vmatprep.subr.mxu0 0.0
    %882 = vmatpush1.msra.mxu0 0.0
    %883 = vmatprep.subr.mxu0 0.0
    %884 = vmatpush1.msra.mxu0 0.0
    %885 = vmatprep.subr.mxu0 0.0
    %886 = vmatpush1.msra.mxu0 0.0
    %887 = vmatprep.subr.mxu0 0.0
    %888 = vmatpush1.msra.mxu0 0.0
    %889 = vmatprep.subr.mxu0 0.0
    %890 = vmatpush1.msra.mxu0 0.0
    %891 = vmatprep.subr.mxu0 0.0
    %892 = vmatpush1.msra.mxu0 0.0
    %893 = vmatprep.subr.mxu0 0.0
    %894 = vmatpush1.msra.mxu0 0.0
    %895 = vmatprep.subr.mxu0 0.0
    %896 = vmatpush1.msra.mxu0 0.0
    %897 = vmatprep.subr.mxu0 0.0
    %898 = vmatpush1.msra.mxu0 0.0
    %899 = vmatprep.subr.mxu0 0.0
    %900 = vmatpush1.msra.mxu0 0.0
    %901 = vmatprep.subr.mxu0 0.0
    %902 = vmatpush1.msra.mxu0 0.0
    %903 = vmatprep.subr.mxu0 0.0
    %904 = vmatpush1.msra.mxu0 0.0
    %905 = vmatprep.subr.mxu0 0.0
    %906 = vmatpush1.msra.mxu0 0.0
    %907 = vmatprep.subr.mxu0 0.0
    %908 = vmatpush1.msra.mxu0 0.0
    %909 = vmatprep.subr.mxu0 0.0
    %910 = vmatpush1.msra.mxu0 0.0
    %911 = vmatprep.subr.mxu0 0.0
    %912 = vmatpush1.msra.mxu0 0.0
    %913 = vmatprep.subr.mxu0 0.0
    %914 = vmatpush1.msra.mxu0 0.0
    %915 = vmatprep.subr.mxu0 0.0
    %916 = vmatpush1.msra.mxu0 0.0
    %917 = vmatprep.mubr.f32.mxu0 0.0
    %918 = vmatmul.mubr.f32.gmra.mrb[0].mxu0 %v851
    %v919 = vpop.f32.mrb[0].mxu0
    %v920 = vadd.f32 0.0, %v919
    %v921 = vpop.f32.mrb[0].mxu0
    %922 = vdwg.mxu0
    %v923 = vadd.f32 %v156, %v920
    %v924 = vmul.f32 %v923, 0.5
    %v925 = vtanh.pop %v924
    %v926 = vmul.f32 %v925, 0.5
    %v927 = vadd.f32 %v926, 0.5
    %v928 = vtanh.pop %v923
    %v929 = vmul.f32 %v927, %v841
    %931 = vrot.lane.b32.xlu0 %v928, 64
    %v932 = vpop.permute.xlu0 %931
    %v934 = vmul.f32 %v927, %v932
    %936 = vrot.lane.b32.xlu0 %v934, 32
    %v937 = vpop.permute.xlu0 %936
    %v939 = vadd.f32 %v929, %v937
    %v940 = vtanh.pop %v939
    %942 = vrot.lane.b32.xlu0 %v940, 64
    %v943 = vpop.permute.xlu0 %942
    %v945 = vmul.f32 %v927, %v943
    %v946 = vpack.c.bf16 %v357, %v259
    %v947 = vpack.c.bf16 %v553, %v455
    %v948 = vpack.c.bf16 %v749, %v651
    %v949 = vpack.c.bf16 %v945, %v847
    %v950 = vld [vmem:[%s4] sm:$0xff]
    %v951 = vld [vmem:[%s4 + $0x8] sm:$0xff]
    %v952 = vld [vmem:[%s4 + $0x10] sm:$0xff]
    %v953 = vld [vmem:[%s4 + $0x18] sm:$0xff]
    %v954 = vld [vmem:[%s4 + $0x20] sm:$0xf]
    %v955 = vld [vmem:[%s4 + $0x24] sm:$0xff]
    %v956 = vld [vmem:[%s4 + $0x2c] sm:$0xff]
    %v957 = vld [vmem:[%s4 + $0x34] sm:$0xff]
    %v958 = vld [vmem:[%s4 + $0x3c] sm:$0xff]
    %v959 = vld [vmem:[%s4 + $0x44] sm:$0xf]
    %v960 = vld [vmem:[%s4 + $0x48] sm:$0xff]
    %v961 = vld [vmem:[%s4 + $0x50] sm:$0xff]
    %v962 = vld [vmem:[%s4 + $0x58] sm:$0xff]
    %v963 = vld [vmem:[%s4 + $0x60] sm:$0xff]
    %v964 = vld [vmem:[%s4 + $0x68] sm:$0xf]
    %v965 = vld [vmem:[%s4 + $0x6c] sm:$0xff]
    %v966 = vld [vmem:[%s4 + $0x74] sm:$0xff]
    %v967 = vld [vmem:[%s4 + $0x7c] sm:$0xff]
    %v968 = vld [vmem:[%s4 + $0x84] sm:$0xff]
    %v969 = vld [vmem:[%s4 + $0x8c] sm:$0xf]
    %v970 = vld [vmem:[%s5] sm:$0xff]
    %v971 = vld [vmem:[%s5 + $0x8] sm:$0x1]
    %v974 = vlaneseq
    %v975 = vshrl.u32 %v974, 7
    %v976 = vsub.s32 0, %v975
    %v977 = vrot.slane %v970, %v976
    %v978 = vlaneseq
    %v979 = vshrl.u32 %v978, 7
    %v980 = vsub.s32 1, %v979
    %v981 = vrot.slane %v970, %v980
    %v982 = vlaneseq
    %v983 = vshrl.u32 %v982, 7
    %v984 = vsub.s32 2, %v983
    %v985 = vrot.slane %v970, %v984
    %v986 = vlaneseq
    %v987 = vshrl.u32 %v986, 7
    %v988 = vsub.s32 3, %v987
    %v989 = vrot.slane %v970, %v988
    %v990 = vlaneseq
    %v991 = vshrl.u32 %v990, 7
    %v992 = vsub.s32 4, %v991
    %v993 = vrot.slane %v970, %v992
    %v994 = vlaneseq
    %v995 = vshrl.u32 %v994, 7
    %v996 = vsub.s32 5, %v995
    %v997 = vrot.slane %v970, %v996
    %v998 = vlaneseq
    %v999 = vshrl.u32 %v998, 7
    %v1000 = vsub.s32 6, %v999
    %v1001 = vrot.slane %v970, %v1000
    %v1002 = vlaneseq
    %v1003 = vshrl.u32 %v1002, 7
    %v1004 = vsub.s32 7, %v1003
    %v1005 = vrot.slane %v970, %v1004
    %v1006 = vlaneseq
    %v1007 = vshrl.u32 %v1006, 7
    %v1008 = vsub.s32 0, %v1007
    %v1009 = vrot.slane %v971, %v1008
    %1023 = vrot.lane.b32.xlu0 %v946, 32
    %v1024 = vpop.permute.xlu0 %1023
    %1025 = vrot.lane.b32.xlu0 %v947, 32
    %v1026 = vpop.permute.xlu0 %1025
    %1027 = vrot.lane.b32.xlu0 %v948, 32
    %v1028 = vpop.permute.xlu0 %1027
    %1029 = vrot.lane.b32.xlu0 %v949, 32
    %v1030 = vpop.permute.xlu0 %1029
    %v1051 = vunpack.c.l.b16 %v950
    %v1052 = vunpack.c.h.b16 %v950
    %v1053 = vunpack.c.l.b16 %v951
    %v1054 = vunpack.c.h.b16 %v951
    %v1055 = vunpack.c.l.b16 %v952
    %v1056 = vunpack.c.h.b16 %v952
    %v1057 = vunpack.c.l.b16 %v953
    %v1058 = vunpack.c.h.b16 %v953
    %v1059 = vunpack.c.l.b16 %v954
    %v1060 = vunpack.c.l.b16 %v955
    %v1061 = vunpack.c.h.b16 %v955
    %v1062 = vunpack.c.l.b16 %v956
    %v1063 = vunpack.c.h.b16 %v956
    %v1064 = vunpack.c.l.b16 %v957
    %v1065 = vunpack.c.h.b16 %v957
    %v1066 = vunpack.c.l.b16 %v958
    %v1067 = vunpack.c.h.b16 %v958
    %v1068 = vunpack.c.l.b16 %v959
    %v1069 = vunpack.c.l.b16 %v960
    %v1070 = vunpack.c.h.b16 %v960
    %v1071 = vunpack.c.l.b16 %v961
    %v1072 = vunpack.c.h.b16 %v961
    %v1073 = vunpack.c.l.b16 %v962
    %v1074 = vunpack.c.h.b16 %v962
    %v1075 = vunpack.c.l.b16 %v963
    %v1076 = vunpack.c.h.b16 %v963
    %v1077 = vunpack.c.l.b16 %v964
    %v1078 = vunpack.c.l.b16 %v965
    %v1079 = vunpack.c.h.b16 %v965
    %v1080 = vunpack.c.l.b16 %v966
    %v1081 = vunpack.c.h.b16 %v966
    %v1082 = vunpack.c.l.b16 %v967
    %v1083 = vunpack.c.h.b16 %v967
    %v1084 = vunpack.c.l.b16 %v968
    %v1085 = vunpack.c.h.b16 %v968
    %v1086 = vunpack.c.l.b16 %v969
    %v1087 = vpack.c.b16 %v1060, %v1051
    %v1088 = vpack.c.b16 %v1061, %v1052
    %v1089 = vpack.c.b16 %v1062, %v1053
    %v1090 = vpack.c.b16 %v1063, %v1054
    %v1091 = vpack.c.b16 %v1064, %v1055
    %v1092 = vpack.c.b16 %v1065, %v1056
    %v1093 = vpack.c.b16 %v1066, %v1057
    %v1094 = vpack.c.b16 %v1067, %v1058
    %v1095 = vpack.c.b16 %v1068, %v1059
    %v1096 = vpack.c.b16 %v1078, %v1069
    %v1097 = vpack.c.b16 %v1079, %v1070
    %v1098 = vpack.c.b16 %v1080, %v1071
    %v1099 = vpack.c.b16 %v1081, %v1072
    %v1100 = vpack.c.b16 %v1082, %v1073
    %v1101 = vpack.c.b16 %v1083, %v1074
    %v1102 = vpack.c.b16 %v1084, %v1075
    %v1103 = vpack.c.b16 %v1085, %v1076
    %v1104 = vpack.c.b16 %v1086, %v1077
    %v1124 = vsel %vm163, %v1024, 0
    %v1127 = vsel %vm163, %v1026, 0
    %v1130 = vsel %vm163, %v1028, 0
    %v1133 = vsel %vm163, %v1030, 0
    %1135 = vmatprep.subr.bf16.mxu0 %v1088
    %1136 = vmatpush1.bf16.msra.mxu0 %v1087
    %1137 = vmatprep.subr.bf16.mxu0 %v1097
    %1138 = vmatpush1.bf16.msra.mxu0 %v1096
    %1139 = vmatprep.subr.bf16.mxu0 0
    %1140 = vmatpush1.bf16.msra.mxu0 0
    %1141 = vmatprep.subr.bf16.mxu0 0
    %1142 = vmatpush1.bf16.msra.mxu0 0
    %1143 = vmatprep.subr.bf16.mxu0 0
    %1144 = vmatpush1.bf16.msra.mxu0 0
    %1145 = vmatprep.subr.bf16.mxu0 0
    %1146 = vmatpush1.bf16.msra.mxu0 0
    %1147 = vmatprep.subr.bf16.mxu0 0
    %1148 = vmatpush1.bf16.msra.mxu0 0
    %1149 = vmatprep.subr.bf16.mxu0 0
    %1150 = vmatpush1.bf16.msra.mxu0 0
    %1151 = vmatprep.subr.bf16.mxu0 0
    %1152 = vmatpush1.bf16.msra.mxu0 0
    %1153 = vmatprep.subr.bf16.mxu0 0
    %1154 = vmatpush1.bf16.msra.mxu0 0
    %1155 = vmatprep.subr.bf16.mxu0 0
    %1156 = vmatpush1.bf16.msra.mxu0 0
    %1157 = vmatprep.subr.bf16.mxu0 0
    %1158 = vmatpush1.bf16.msra.mxu0 0
    %1159 = vmatprep.subr.bf16.mxu0 0
    %1160 = vmatpush1.bf16.msra.mxu0 0
    %1161 = vmatprep.subr.bf16.mxu0 0
    %1162 = vmatpush1.bf16.msra.mxu0 0
    %1163 = vmatprep.subr.bf16.mxu0 0
    %1164 = vmatpush1.bf16.msra.mxu0 0
    %1165 = vmatprep.subr.bf16.mxu0 0
    %1166 = vmatpush1.bf16.msra.mxu0 0
    %1167 = vmatprep.mubr.bf16.mxu0 0
    %1168 = vmatmul.mubr.bf16.gmra.mrb[0].mxu0 %v1124
    %v1169 = vpop.f32.mrb[0].mxu0
    %v1170 = vadd.f32 %v977, %v1169
    %v1171 = vpop.f32.mrb[0].mxu0
    %v1172 = vadd.f32 %v981, %v1171
    %v1173 = vpop.f32.mrb[0].mxu0
    %v1174 = vadd.f32 %v977, %v1173
    %v1175 = vpop.f32.mrb[0].mxu0
    %v1176 = vadd.f32 %v981, %v1175
    %1177 = vmatprep.mubr.bf16.mxu0 0
    %1178 = vmatmul.mubr.bf16.gmra.mrb[0].mxu0 %v1127
    %v1179 = vpop.f32.mrb[0].mxu0
    %v1180 = vadd.f32 %v977, %v1179
    %v1181 = vpop.f32.mrb[0].mxu0
    %v1182 = vadd.f32 %v981, %v1181
    %v1183 = vpop.f32.mrb[0].mxu0
    %v1184 = vadd.f32 %v977, %v1183
    %v1185 = vpop.f32.mrb[0].mxu0
    %v1186 = vadd.f32 %v981, %v1185
    %1187 = vmatprep.mubr.bf16.mxu0 0
    %1188 = vmatmul.mubr.bf16.gmra.mrb[0].mxu0 %v1130
    %v1189 = vpop.f32.mrb[0].mxu0
    %v1190 = vadd.f32 %v977, %v1189
    %v1191 = vpop.f32.mrb[0].mxu0
    %v1192 = vadd.f32 %v981, %v1191
    %v1193 = vpop.f32.mrb[0].mxu0
    %v1194 = vadd.f32 %v977, %v1193
    %v1195 = vpop.f32.mrb[0].mxu0
    %v1196 = vadd.f32 %v981, %v1195
    %1197 = vmatprep.mubr.bf16.mxu0 0
    %1198 = vmatmul.mubr.bf16.gmra.mrb[0].mxu0 %v1133
    %v1199 = vpop.f32.mrb[0].mxu0
    %v1200 = vadd.f32 %v977, %v1199
    %v1201 = vpop.f32.mrb[0].mxu0
    %v1202 = vadd.f32 %v981, %v1201
    %v1203 = vpop.f32.mrb[0].mxu0
    %v1204 = vadd.f32 %v977, %v1203
    %v1205 = vpop.f32.mrb[0].mxu0
    %v1206 = vadd.f32 %v981, %v1205
    %1207 = vdwg.mxu0
    %1208 = vmatprep.subr.bf16.mxu0 %v1090
    %1209 = vmatpush1.bf16.msra.mxu0 %v1089
    %1210 = vmatprep.subr.bf16.mxu0 %v1099
    %1211 = vmatpush1.bf16.msra.mxu0 %v1098
    %1212 = vmatprep.subr.bf16.mxu0 0
    %1213 = vmatpush1.bf16.msra.mxu0 0
    %1214 = vmatprep.subr.bf16.mxu0 0
    %1215 = vmatpush1.bf16.msra.mxu0 0
    %1216 = vmatprep.subr.bf16.mxu0 0
    %1217 = vmatpush1.bf16.msra.mxu0 0
    %1218 = vmatprep.subr.bf16.mxu0 0
    %1219 = vmatpush1.bf16.msra.mxu0 0
    %1220 = vmatprep.subr.bf16.mxu0 0
    %1221 = vmatpush1.bf16.msra.mxu0 0
    %1222 = vmatprep.subr.bf16.mxu0 0
    %1223 = vmatpush1.bf16.msra.mxu0 0
    %1224 = vmatprep.subr.bf16.mxu0 0
    %1225 = vmatpush1.bf16.msra.mxu0 0
    %1226 = vmatprep.subr.bf16.mxu0 0
    %1227 = vmatpush1.bf16.msra.mxu0 0
    %1228 = vmatprep.subr.bf16.mxu0 0
    %1229 = vmatpush1.bf16.msra.mxu0 0
    %1230 = vmatprep.subr.bf16.mxu0 0
    %1231 = vmatpush1.bf16.msra.mxu0 0
    %1232 = vmatprep.subr.bf16.mxu0 0
    %1233 = vmatpush1.bf16.msra.mxu0 0
    %1234 = vmatprep.subr.bf16.mxu0 0
    %1235 = vmatpush1.bf16.msra.mxu0 0
    %1236 = vmatprep.subr.bf16.mxu0 0
    %1237 = vmatpush1.bf16.msra.mxu0 0
    %1238 = vmatprep.subr.bf16.mxu0 0
    %1239 = vmatpush1.bf16.msra.mxu0 0
    %1240 = vmatprep.mubr.bf16.mxu0 0
    %1241 = vmatmul.mubr.bf16.gmra.mrb[0].mxu0 %v1124
    %v1242 = vpop.f32.mrb[0].mxu0
    %v1243 = vadd.f32 %v985, %v1242
    %v1244 = vpop.f32.mrb[0].mxu0
    %v1245 = vadd.f32 %v989, %v1244
    %v1246 = vpop.f32.mrb[0].mxu0
    %v1247 = vadd.f32 %v985, %v1246
    %v1248 = vpop.f32.mrb[0].mxu0
    %v1249 = vadd.f32 %v989, %v1248
    %1250 = vmatprep.mubr.bf16.mxu0 0
    %1251 = vmatmul.mubr.bf16.gmra.mrb[0].mxu0 %v1127
    %v1252 = vpop.f32.mrb[0].mxu0
    %v1253 = vadd.f32 %v985, %v1252
    %v1254 = vpop.f32.mrb[0].mxu0
    %v1255 = vadd.f32 %v989, %v1254
    %v1256 = vpop.f32.mrb[0].mxu0
    %v1257 = vadd.f32 %v985, %v1256
    %v1258 = vpop.f32.mrb[0].mxu0
    %v1259 = vadd.f32 %v989, %v1258
    %1260 = vmatprep.mubr.bf16.mxu0 0
    %1261 = vmatmul.mubr.bf16.gmra.mrb[0].mxu0 %v1130
    %v1262 = vpop.f32.mrb[0].mxu0
    %v1263 = vadd.f32 %v985, %v1262
    %v1264 = vpop.f32.mrb[0].mxu0
    %v1265 = vadd.f32 %v989, %v1264
    %v1266 = vpop.f32.mrb[0].mxu0
    %v1267 = vadd.f32 %v985, %v1266
    %v1268 = vpop.f32.mrb[0].mxu0
    %v1269 = vadd.f32 %v989, %v1268
    %1270 = vmatprep.mubr.bf16.mxu0 0
    %1271 = vmatmul.mubr.bf16.gmra.mrb[0].mxu0 %v1133
    %v1272 = vpop.f32.mrb[0].mxu0
    %v1273 = vadd.f32 %v985, %v1272
    %v1274 = vpop.f32.mrb[0].mxu0
    %v1275 = vadd.f32 %v989, %v1274
    %v1276 = vpop.f32.mrb[0].mxu0
    %v1277 = vadd.f32 %v985, %v1276
    %v1278 = vpop.f32.mrb[0].mxu0
    %v1279 = vadd.f32 %v989, %v1278
    %1280 = vdwg.mxu0
    %1281 = vmatprep.subr.bf16.mxu0 %v1092
    %1282 = vmatpush1.bf16.msra.mxu0 %v1091
    %1283 = vmatprep.subr.bf16.mxu0 %v1101
    %1284 = vmatpush1.bf16.msra.mxu0 %v1100
    %1285 = vmatprep.subr.bf16.mxu0 0
    %1286 = vmatpush1.bf16.msra.mxu0 0
    %1287 = vmatprep.subr.bf16.mxu0 0
    %1288 = vmatpush1.bf16.msra.mxu0 0
    %1289 = vmatprep.subr.bf16.mxu0 0
    %1290 = vmatpush1.bf16.msra.mxu0 0
    %1291 = vmatprep.subr.bf16.mxu0 0
    %1292 = vmatpush1.bf16.msra.mxu0 0
    %1293 = vmatprep.subr.bf16.mxu0 0
    %1294 = vmatpush1.bf16.msra.mxu0 0
    %1295 = vmatprep.subr.bf16.mxu0 0
    %1296 = vmatpush1.bf16.msra.mxu0 0
    %1297 = vmatprep.subr.bf16.mxu0 0
    %1298 = vmatpush1.bf16.msra.mxu0 0
    %1299 = vmatprep.subr.bf16.mxu0 0
    %1300 = vmatpush1.bf16.msra.mxu0 0
    %1301 = vmatprep.subr.bf16.mxu0 0
    %1302 = vmatpush1.bf16.msra.mxu0 0
    %1303 = vmatprep.subr.bf16.mxu0 0
    %1304 = vmatpush1.bf16.msra.mxu0 0
    %1305 = vmatprep.subr.bf16.mxu0 0
    %1306 = vmatpush1.bf16.msra.mxu0 0
    %1307 = vmatprep.subr.bf16.mxu0 0
    %1308 = vmatpush1.bf16.msra.mxu0 0
    %1309 = vmatprep.subr.bf16.mxu0 0
    %1310 = vmatpush1.bf16.msra.mxu0 0
    %1311 = vmatprep.subr.bf16.mxu0 0
    %1312 = vmatpush1.bf16.msra.mxu0 0
    %1313 = vmatprep.mubr.bf16.mxu0 0
    %1314 = vmatmul.mubr.bf16.gmra.mrb[0].mxu0 %v1124
    %v1315 = vpop.f32.mrb[0].mxu0
    %v1316 = vadd.f32 %v993, %v1315
    %v1317 = vpop.f32.mrb[0].mxu0
    %v1318 = vadd.f32 %v997, %v1317
    %v1319 = vpop.f32.mrb[0].mxu0
    %v1320 = vadd.f32 %v993, %v1319
    %v1321 = vpop.f32.mrb[0].mxu0
    %v1322 = vadd.f32 %v997, %v1321
    %1323 = vmatprep.mubr.bf16.mxu0 0
    %1324 = vmatmul.mubr.bf16.gmra.mrb[0].mxu0 %v1127
    %v1325 = vpop.f32.mrb[0].mxu0
    %v1326 = vadd.f32 %v993, %v1325
    %v1327 = vpop.f32.mrb[0].mxu0
    %v1328 = vadd.f32 %v997, %v1327
    %v1329 = vpop.f32.mrb[0].mxu0
    %v1330 = vadd.f32 %v993, %v1329
    %v1331 = vpop.f32.mrb[0].mxu0
    %v1332 = vadd.f32 %v997, %v1331
    %1333 = vmatprep.mubr.bf16.mxu0 0
    %1334 = vmatmul.mubr.bf16.gmra.mrb[0].mxu0 %v1130
    %v1335 = vpop.f32.mrb[0].mxu0
    %v1336 = vadd.f32 %v993, %v1335
    %v1337 = vpop.f32.mrb[0].mxu0
    %v1338 = vadd.f32 %v997, %v1337
    %v1339 = vpop.f32.mrb[0].mxu0
    %v1340 = vadd.f32 %v993, %v1339
    %v1341 = vpop.f32.mrb[0].mxu0
    %v1342 = vadd.f32 %v997, %v1341
    %1343 = vmatprep.mubr.bf16.mxu0 0
    %1344 = vmatmul.mubr.bf16.gmra.mrb[0].mxu0 %v1133
    %v1345 = vpop.f32.mrb[0].mxu0
    %v1346 = vadd.f32 %v993, %v1345
    %v1347 = vpop.f32.mrb[0].mxu0
    %v1348 = vadd.f32 %v997, %v1347
    %v1349 = vpop.f32.mrb[0].mxu0
    %v1350 = vadd.f32 %v993, %v1349
    %v1351 = vpop.f32.mrb[0].mxu0
    %v1352 = vadd.f32 %v997, %v1351
    %1353 = vdwg.mxu0
    %1354 = vmatprep.subr.bf16.mxu0 %v1094
    %1355 = vmatpush1.bf16.msra.mxu0 %v1093
    %1356 = vmatprep.subr.bf16.mxu0 %v1103
    %1357 = vmatpush1.bf16.msra.mxu0 %v1102
    %1358 = vmatprep.subr.bf16.mxu0 0
    %1359 = vmatpush1.bf16.msra.mxu0 0
    %1360 = vmatprep.subr.bf16.mxu0 0
    %1361 = vmatpush1.bf16.msra.mxu0 0
    %1362 = vmatprep.subr.bf16.mxu0 0
    %1363 = vmatpush1.bf16.msra.mxu0 0
    %1364 = vmatprep.subr.bf16.mxu0 0
    %1365 = vmatpush1.bf16.msra.mxu0 0
    %1366 = vmatprep.subr.bf16.mxu0 0
    %1367 = vmatpush1.bf16.msra.mxu0 0
    %1368 = vmatprep.subr.bf16.mxu0 0
    %1369 = vmatpush1.bf16.msra.mxu0 0
    %1370 = vmatprep.subr.bf16.mxu0 0
    %1371 = vmatpush1.bf16.msra.mxu0 0
    %1372 = vmatprep.subr.bf16.mxu0 0
    %1373 = vmatpush1.bf16.msra.mxu0 0
    %1374 = vmatprep.subr.bf16.mxu0 0
    %1375 = vmatpush1.bf16.msra.mxu0 0
    %1376 = vmatprep.subr.bf16.mxu0 0
    %1377 = vmatpush1.bf16.msra.mxu0 0
    %1378 = vmatprep.subr.bf16.mxu0 0
    %1379 = vmatpush1.bf16.msra.mxu0 0
    %1380 = vmatprep.subr.bf16.mxu0 0
    %1381 = vmatpush1.bf16.msra.mxu0 0
    %1382 = vmatprep.subr.bf16.mxu0 0
    %1383 = vmatpush1.bf16.msra.mxu0 0
    %1384 = vmatprep.subr.bf16.mxu0 0
    %1385 = vmatpush1.bf16.msra.mxu0 0
    %1386 = vmatprep.mubr.bf16.mxu0 0
    %1387 = vmatmul.mubr.bf16.gmra.mrb[0].mxu0 %v1124
    %v1388 = vpop.f32.mrb[0].mxu0
    %v1389 = vadd.f32 %v1001, %v1388
    %v1390 = vpop.f32.mrb[0].mxu0
    %v1391 = vadd.f32 %v1005, %v1390
    %v1392 = vpop.f32.mrb[0].mxu0
    %v1393 = vadd.f32 %v1001, %v1392
    %v1394 = vpop.f32.mrb[0].mxu0
    %v1395 = vadd.f32 %v1005, %v1394
    %1396 = vmatprep.mubr.bf16.mxu0 0
    %1397 = vmatmul.mubr.bf16.gmra.mrb[0].mxu0 %v1127
    %v1398 = vpop.f32.mrb[0].mxu0
    %v1399 = vadd.f32 %v1001, %v1398
    %v1400 = vpop.f32.mrb[0].mxu0
    %v1401 = vadd.f32 %v1005, %v1400
    %v1402 = vpop.f32.mrb[0].mxu0
    %v1403 = vadd.f32 %v1001, %v1402
    %v1404 = vpop.f32.mrb[0].mxu0
    %v1405 = vadd.f32 %v1005, %v1404
    %1406 = vmatprep.mubr.bf16.mxu0 0
    %1407 = vmatmul.mubr.bf16.gmra.mrb[0].mxu0 %v1130
    %v1408 = vpop.f32.mrb[0].mxu0
    %v1409 = vadd.f32 %v1001, %v1408
    %v1410 = vpop.f32.mrb[0].mxu0
    %v1411 = vadd.f32 %v1005, %v1410
    %v1412 = vpop.f32.mrb[0].mxu0
    %v1413 = vadd.f32 %v1001, %v1412
    %v1414 = vpop.f32.mrb[0].mxu0
    %v1415 = vadd.f32 %v1005, %v1414
    %1416 = vmatprep.mubr.bf16.mxu0 0
    %1417 = vmatmul.mubr.bf16.gmra.mrb[0].mxu0 %v1133
    %v1418 = vpop.f32.mrb[0].mxu0
    %v1419 = vadd.f32 %v1001, %v1418
    %v1420 = vpop.f32.mrb[0].mxu0
    %v1421 = vadd.f32 %v1005, %v1420
    %v1422 = vpop.f32.mrb[0].mxu0
    %v1423 = vadd.f32 %v1001, %v1422
    %v1424 = vpop.f32.mrb[0].mxu0
    %v1425 = vadd.f32 %v1005, %v1424
    %1426 = vdwg.mxu0
    %1427 = vmatprep.subr.bf16.mxu0 0
    %1428 = vmatpush1.bf16.msra.mxu0 %v1095
    %1429 = vmatprep.subr.bf16.mxu0 0
    %1430 = vmatpush1.bf16.msra.mxu0 %v1104
    %1431 = vmatprep.subr.bf16.mxu0 0
    %1432 = vmatpush1.bf16.msra.mxu0 0
    %1433 = vmatprep.subr.bf16.mxu0 0
    %1434 = vmatpush1.bf16.msra.mxu0 0
    %1435 = vmatprep.subr.bf16.mxu0 0
    %1436 = vmatpush1.bf16.msra.mxu0 0
    %1437 = vmatprep.subr.bf16.mxu0 0
    %1438 = vmatpush1.bf16.msra.mxu0 0
    %1439 = vmatprep.subr.bf16.mxu0 0
    %1440 = vmatpush1.bf16.msra.mxu0 0
    %1441 = vmatprep.subr.bf16.mxu0 0
    %1442 = vmatpush1.bf16.msra.mxu0 0
    %1443 = vmatprep.subr.bf16.mxu0 0
    %1444 = vmatpush1.bf16.msra.mxu0 0
    %1445 = vmatprep.subr.bf16.mxu0 0
    %1446 = vmatpush1.bf16.msra.mxu0 0
    %1447 = vmatprep.subr.bf16.mxu0 0
    %1448 = vmatpush1.bf16.msra.mxu0 0
    %1449 = vmatprep.subr.bf16.mxu0 0
    %1450 = vmatpush1.bf16.msra.mxu0 0
    %1451 = vmatprep.subr.bf16.mxu0 0
    %1452 = vmatpush1.bf16.msra.mxu0 0
    %1453 = vmatprep.subr.bf16.mxu0 0
    %1454 = vmatpush1.bf16.msra.mxu0 0
    %1455 = vmatprep.subr.bf16.mxu0 0
    %1456 = vmatpush1.bf16.msra.mxu0 0
    %1457 = vmatprep.subr.bf16.mxu0 0
    %1458 = vmatpush1.bf16.msra.mxu0 0
    %1459 = vmatprep.mubr.bf16.mxu0 0
    %1460 = vmatmul.mubr.bf16.gmra.mrb[0].mxu0 %v1124
    %v1461 = vpop.f32.mrb[0].mxu0
    %v1462 = vadd.f32 %v1009, %v1461
    %v1463 = vpop.f32.mrb[0].mxu0
    %v1464 = vpop.f32.mrb[0].mxu0
    %v1465 = vadd.f32 %v1009, %v1464
    %v1466 = vpop.f32.mrb[0].mxu0
    %1467 = vmatprep.mubr.bf16.mxu0 0
    %1468 = vmatmul.mubr.bf16.gmra.mrb[0].mxu0 %v1127
    %v1469 = vpop.f32.mrb[0].mxu0
    %v1470 = vadd.f32 %v1009, %v1469
    %v1471 = vpop.f32.mrb[0].mxu0
    %v1472 = vpop.f32.mrb[0].mxu0
    %v1473 = vadd.f32 %v1009, %v1472
    %v1474 = vpop.f32.mrb[0].mxu0
    %1475 = vmatprep.mubr.bf16.mxu0 0
    %1476 = vmatmul.mubr.bf16.gmra.mrb[0].mxu0 %v1130
    %v1477 = vpop.f32.mrb[0].mxu0
    %v1478 = vadd.f32 %v1009, %v1477
    %v1479 = vpop.f32.mrb[0].mxu0
    %v1480 = vpop.f32.mrb[0].mxu0
    %v1481 = vadd.f32 %v1009, %v1480
    %v1482 = vpop.f32.mrb[0].mxu0
    %1483 = vmatprep.mubr.bf16.mxu0 0
    %1484 = vmatmul.mubr.bf16.gmra.mrb[0].mxu0 %v1133
    %v1485 = vpop.f32.mrb[0].mxu0
    %v1486 = vadd.f32 %v1009, %v1485
    %v1487 = vpop.f32.mrb[0].mxu0
    %v1488 = vpop.f32.mrb[0].mxu0
    %v1489 = vadd.f32 %v1009, %v1488
    %v1490 = vpop.f32.mrb[0].mxu0
    %1491 = vdwg.mxu0
    %1492 = vst [vmem:[%s6] sm:$0xff] %v1170
    %1493 = vst [vmem:[%s6 + $0x8] sm:$0xff] %v1172
    %1494 = vst [vmem:[%s6 + $0x10] sm:$0xff] %v1243
    %1495 = vst [vmem:[%s6 + $0x18] sm:$0xff] %v1245
    %1496 = vst [vmem:[%s6 + $0x20] sm:$0xff] %v1316
    %1497 = vst [vmem:[%s6 + $0x28] sm:$0xff] %v1318
    %1498 = vst [vmem:[%s6 + $0x30] sm:$0xff] %v1389
    %1499 = vst [vmem:[%s6 + $0x38] sm:$0xff] %v1391
    %1500 = vst [vmem:[%s6 + $0x40] sm:$0xff] %v1462
    %1501 = vst [vmem:[%s6 + $0x48] sm:$0xff] %v1174
    %1502 = vst [vmem:[%s6 + $0x50] sm:$0xff] %v1176
    %1503 = vst [vmem:[%s6 + $0x58] sm:$0xff] %v1247
    %1504 = vst [vmem:[%s6 + $0x60] sm:$0xff] %v1249
    %1505 = vst [vmem:[%s6 + $0x68] sm:$0xff] %v1320
    %1506 = vst [vmem:[%s6 + $0x70] sm:$0xff] %v1322
    %1507 = vst [vmem:[%s6 + $0x78] sm:$0xff] %v1393
    %1508 = vst [vmem:[%s6 + $0x80] sm:$0xff] %v1395
    %1509 = vst [vmem:[%s6 + $0x88] sm:$0xff] %v1465
    %1510 = vst [vmem:[%s6 + $0x90] sm:$0xff] %v1180
    %1511 = vst [vmem:[%s6 + $0x98] sm:$0xff] %v1182
    %1512 = vst [vmem:[%s6 + $0xa0] sm:$0xff] %v1253
    %1513 = vst [vmem:[%s6 + $0xa8] sm:$0xff] %v1255
    %1514 = vst [vmem:[%s6 + $0xb0] sm:$0xff] %v1326
    %1515 = vst [vmem:[%s6 + $0xb8] sm:$0xff] %v1328
    %1516 = vst [vmem:[%s6 + $0xc0] sm:$0xff] %v1399
    %1517 = vst [vmem:[%s6 + $0xc8] sm:$0xff] %v1401
    %1518 = vst [vmem:[%s6 + $0xd0] sm:$0xff] %v1470
    %1519 = vst [vmem:[%s6 + $0xd8] sm:$0xff] %v1184
    %1520 = vst [vmem:[%s6 + $0xe0] sm:$0xff] %v1186
    %1521 = vst [vmem:[%s6 + $0xe8] sm:$0xff] %v1257
    %1522 = vst [vmem:[%s6 + $0xf0] sm:$0xff] %v1259
    %1523 = vst [vmem:[%s6 + $0xf8] sm:$0xff] %v1330
    %1524 = vst [vmem:[%s6 + $0x100] sm:$0xff] %v1332
    %1525 = vst [vmem:[%s6 + $0x108] sm:$0xff] %v1403
    %1526 = vst [vmem:[%s6 + $0x110] sm:$0xff] %v1405
    %1527 = vst [vmem:[%s6 + $0x118] sm:$0xff] %v1473
    %1528 = vst [vmem:[%s6 + $0x120] sm:$0xff] %v1190
    %1529 = vst [vmem:[%s6 + $0x128] sm:$0xff] %v1192
    %1530 = vst [vmem:[%s6 + $0x130] sm:$0xff] %v1263
    %1531 = vst [vmem:[%s6 + $0x138] sm:$0xff] %v1265
    %1532 = vst [vmem:[%s6 + $0x140] sm:$0xff] %v1336
    %1533 = vst [vmem:[%s6 + $0x148] sm:$0xff] %v1338
    %1534 = vst [vmem:[%s6 + $0x150] sm:$0xff] %v1409
    %1535 = vst [vmem:[%s6 + $0x158] sm:$0xff] %v1411
    %1536 = vst [vmem:[%s6 + $0x160] sm:$0xff] %v1478
    %1537 = vst [vmem:[%s6 + $0x168] sm:$0xff] %v1194
    %1538 = vst [vmem:[%s6 + $0x170] sm:$0xff] %v1196
    %1539 = vst [vmem:[%s6 + $0x178] sm:$0xff] %v1267
    %1540 = vst [vmem:[%s6 + $0x180] sm:$0xff] %v1269
    %1541 = vst [vmem:[%s6 + $0x188] sm:$0xff] %v1340
    %1542 = vst [vmem:[%s6 + $0x190] sm:$0xff] %v1342
    %1543 = vst [vmem:[%s6 + $0x198] sm:$0xff] %v1413
    %1544 = vst [vmem:[%s6 + $0x1a0] sm:$0xff] %v1415
    %1545 = vst [vmem:[%s6 + $0x1a8] sm:$0xff] %v1481
    %1546 = vst [vmem:[%s6 + $0x1b0] sm:$0xff] %v1200
    %1547 = vst [vmem:[%s6 + $0x1b8] sm:$0xff] %v1202
    %1548 = vst [vmem:[%s6 + $0x1c0] sm:$0xff] %v1273
    %1549 = vst [vmem:[%s6 + $0x1c8] sm:$0xff] %v1275
    %1550 = vst [vmem:[%s6 + $0x1d0] sm:$0xff] %v1346
    %1551 = vst [vmem:[%s6 + $0x1d8] sm:$0xff] %v1348
    %1552 = vst [vmem:[%s6 + $0x1e0] sm:$0xff] %v1419
    %1553 = vst [vmem:[%s6 + $0x1e8] sm:$0xff] %v1421
    %1554 = vst [vmem:[%s6 + $0x1f0] sm:$0xff] %v1486
    %1555 = vst [vmem:[%s6 + $0x1f8] sm:$0xff] %v1204
    %1556 = vst [vmem:[%s6 + $0x200] sm:$0xff] %v1206
    %1557 = vst [vmem:[%s6 + $0x208] sm:$0xff] %v1277
    %1558 = vst [vmem:[%s6 + $0x210] sm:$0xff] %v1279
    %1559 = vst [vmem:[%s6 + $0x218] sm:$0xff] %v1350
    %1560 = vst [vmem:[%s6 + $0x220] sm:$0xff] %v1352
    %1561 = vst [vmem:[%s6 + $0x228] sm:$0xff] %v1423
    %1562 = vst [vmem:[%s6 + $0x230] sm:$0xff] %v1425
    %1563 = vst [vmem:[%s6 + $0x238] sm:$0xff] %v1489
    // Predicated region
    $region30: #{recurrent_predictor_forward.1} parent=1 // pred_check
      _
    $region31: #{recurrent_predictor_forward.1} parent=1 // pred_check_branch
      %1565 = sbr.rel (0) target = $region33
    $region32: #{recurrent_predictor_forward.1} parent=1 // pred_region
      _
    $region33: #{recurrent_predictor_forward.1} parent=1 // pred_fallthru
      _
    // Predicated region
    $region34: #{recurrent_predictor_forward.1} parent=1 // pred_check
      _
    $region35: #{recurrent_predictor_forward.1} parent=1 // pred_check_branch
      %1567 = sbr.rel (0) target = $region37
    $region36: #{recurrent_predictor_forward.1} parent=1 // pred_region
      _
    $region37: #{recurrent_predictor_forward.1} parent=1 // pred_fallthru
      _
    %1568 = vsyncpa [#allocation3], 1

</llo_original>
